<compile_context>
chip_gen: v5e
topology: v5e:2x2
jax: 0.10.0
libtpu: 0.0.40
codegen_flags: <defaults>
</compile_context>

<pallas_src>
import functools
import math

import jax
import jax.numpy as jnp
from jax.experimental import pallas as pl
from jax.experimental.pallas import tpu as pltpu

EPS = 1e-5  # nn.LayerNorm default


def attention_pooling_kernel(x_ref, *refs, num_heads, fuse_kv):
    """One batch tile: pool -> MHA(1 query) -> +LN -> FFN -> +LN."""
    o_ref = refs[-1]
    if fuse_kv:
        (wq_ref, bq_ref, wkv_ref, bkv_ref, wo_ref, bo_ref,
         g1_ref, be1_ref, w1_ref, b1_ref, w2_ref, b2_ref,
         g2_ref, be2_ref, e_ref, et_ref) = refs[:-1]
    else:
        (wq_ref, bq_ref, wk_ref, bk_ref, wv_ref, bv_ref, wo_ref, bo_ref,
         g1_ref, be1_ref, w1_ref, b1_ref, w2_ref, b2_ref,
         g2_ref, be2_ref, e_ref, et_ref) = refs[:-1]

    TB, L, D = x_ref.shape
    cdt = wq_ref.dtype              # bf16: native MXU operand dtype

    x_raw = x_ref[...]
    # NOTE: (TB, L, D) <-> (TB*L, D) reshapes are free views only when L % 8 == 0;
    # otherwise Mosaic inserts a relayout copy (still correct, just slower).
    x2d = x_raw.astype(cdt).reshape(TB * L, D)
    xf = x_raw.astype(jnp.float32)

    # --- AdaptiveAvgPool2d((1, D)) == mean over L ---
    pooled = jnp.mean(xf, axis=1)                                    # (TB, D) f32

    # --- Q projection (1/sqrt(dh) scale pre-folded into wq/bq by the wrapper) ---
    q = jnp.dot(pooled.astype(cdt), wq_ref[...],
                preferred_element_type=jnp.float32) + bq_ref[...].astype(jnp.float32)

    # --- K / V projections at M = TB*L (fused weight push when D % 128 == 0) ---
    if fuse_kv:
        kv = jnp.dot(x2d, wkv_ref[...],
                     preferred_element_type=jnp.float32) + bkv_ref[...].astype(jnp.float32)
        k, v = kv[:, :D], kv[:, D:]   # lane-tile-aligned static slices (D % 128 == 0)
    else:
        k = jnp.dot(x2d, wk_ref[...],
                    preferred_element_type=jnp.float32) + bk_ref[...].astype(jnp.float32)
        v = jnp.dot(x2d, wv_ref[...],
                    preferred_element_type=jnp.float32) + bv_ref[...].astype(jnp.float32)
    k3 = k.reshape(TB, L, D)
    v3 = v.reshape(TB, L, D)

    # --- multi-head attention, query length 1.  E / Et are precomputed
    #     head-indicator matrices, so per-head math stays at full D lane width
    #     (no sub-vreg slicing/concat, no per-step iota rebuild). ---
    qk = q[:, None, :] * k3                                          # (TB, L, D) VPU
    s = jnp.dot(qk.reshape(TB * L, D), e_ref[...],                   # per-head reduce
                preferred_element_type=jnp.float32).reshape(TB, L, num_heads)

    m = jnp.max(s, axis=1, keepdims=True)                            # softmax over L
    p = jnp.exp(s - m)
    denom = jnp.sum(p, axis=1, keepdims=True)
    p = p * pl.reciprocal(denom, approx=True)                        # EUP slot (free)

    p_full = jnp.dot(p.reshape(TB * L, num_heads), et_ref[...],      # expand to D lanes
                     preferred_element_type=jnp.float32).reshape(TB, L, D)
    attn = jnp.sum(p_full * v3, axis=1)                              # (TB, D)

    mab = jnp.dot(attn.astype(cdt), wo_ref[...],
                  preferred_element_type=jnp.float32) + bo_ref[...].astype(jnp.float32)

    # --- residual + LayerNorm 1.  (Padded batch rows are all-zero -> var 0; the
    #     rsqrt(EPS) result is finite and those rows are discarded by the wrapper.)
    r1 = pooled + mab
    mu1 = jnp.mean(r1, axis=-1, keepdims=True)
    var1 = jnp.mean(jnp.square(r1 - mu1), axis=-1, keepdims=True)
    n1 = ((r1 - mu1) * jax.lax.rsqrt(var1 + EPS)
          * g1_ref[...].astype(jnp.float32) + be1_ref[...].astype(jnp.float32))

    # --- FFN: D -> hidden -> D with ReLU ---
    hdn = jnp.dot(n1.astype(cdt), w1_ref[...],
                  preferred_element_type=jnp.float32) + b1_ref[...].astype(jnp.float32)
    hdn = jnp.maximum(hdn, 0.0)
    f = jnp.dot(hdn.astype(cdt), w2_ref[...],
                preferred_element_type=jnp.float32) + b2_ref[...].astype(jnp.float32)

    # --- residual + LayerNorm 2 ---
    r2 = n1 + f
    mu2 = jnp.mean(r2, axis=-1, keepdims=True)
    var2 = jnp.mean(jnp.square(r2 - mu2), axis=-1, keepdims=True)
    n2 = ((r2 - mu2) * jax.lax.rsqrt(var2 + EPS)
          * g2_ref[...].astype(jnp.float32) + be2_ref[...].astype(jnp.float32))

    # Lane-dense 2-D store (reshaped to (B, 1, D) by the wrapper).
    # TODO(synk): if production D < 128, repack 128//D batch rows per stored row
    # so the store is full lane width (biggest store-side lever on v5e).
    o_ref[...] = n2.astype(o_ref.dtype)


def _chip_config():
    """Generation-aware VMEM budget / limit and minimum grid-step count."""
    try:
        kind = jax.devices()[0].device_kind.lower()
    except Exception:
        kind = ""
    if "v7" in kind:            # 2 TensorCores / chip, 64 MiB VMEM per TC
        return dict(vmem_limit=48 << 20, budget=44 << 20, min_steps=2)
    if "v6" in kind or ("v5" in kind and ("lite" in kind or "v5e" in kind)):
        # 1 TensorCore, 128 MiB VMEM: single grid step whenever it fits.
        return dict(vmem_limit=100 << 20, budget=88 << 20, min_steps=1)
    # Unknown / v4 / v5p (megacore, 2 TCs): conservative budget, keep >= 2 steps.
    return dict(vmem_limit=64 << 20, budget=56 << 20, min_steps=2)


def _choose_block_b(B, L, D, hidden, in_itemsize, out_itemsize, w_bytes, cfg):
    """Batch tile: multiple of 8, as large as honest VMEM accounting allows
    (MXU wants M >= 128-256); single step on 1-TC chips, >= 2 on 2-TC chips."""
    per_row = (2 * L * D * in_itemsize      # double-buffered x tile
               + 10 * L * D * 4             # live f32 (L, D) intermediates
               + 2 * hidden * 4             # FFN hidden activations
               + 2 * D * out_itemsize       # double-buffered output tile
               + 16 * D * 4)                # pooled/q/attn/mab/LN rows, slack
    avail = max(cfg["budget"] - 2 * w_bytes, 1 << 20)   # weights (possibly 2x-buffered)
    tb_max = min(512, max(8, (avail // per_row) // 8 * 8))

    b8 = ((B + 7) // 8) * 8
    if cfg["min_steps"] <= 1:
        return min(tb_max, b8)              # one grid step whenever it fits
    half = ((b8 + 15) // 16) * 8            # ceil(b8/2) rounded up to 8
    return min(tb_max, max(8, half))        # >= 2 steps so both TCs get work


def _const_index_map(ndim):
    zero = (0,) * ndim
    return lambda b: zero


def attention_pooling(x, params, num_heads, *, block_b=None):
    """x: (B, L, D) f32 -> (B, 1, D).  Matmul weights run on the MXU in bf16
    with f32 accumulation; biases / LayerNorm params stay f32."""
    B, L, D = x.shape
    assert D % num_heads == 0, "dim must be divisible by num_heads"
    dh = D // num_heads
    hidden = params["w1"].shape[1]
    cfg = _chip_config()

    # --- one-time weight prep (host/XLA side) ---
    scale = 1.0 / math.sqrt(dh)
    wq = (params["wq"] * scale).astype(jnp.bfloat16)   # fold 1/sqrt(dh) into Q proj
    bq = (params["bq"] * scale).astype(jnp.float32)
    wo = params["wo"].astype(jnp.bfloat16)
    w1 = params["w1"].astype(jnp.bfloat16)
    w2 = params["w2"].astype(jnp.bfloat16)
    fuse_kv = (D % 128) == 0
    if fuse_kv:
        wkv = jnp.concatenate([params["wk"], params["wv"]], axis=1).astype(jnp.bfloat16)
        bkv = jnp.concatenate([params["bk"], params["bv"]], axis=1).astype(jnp.float32)
        proj = [wq, bq, wkv, bkv, wo, params["bo"].astype(jnp.float32)]
    else:
        proj = [wq, bq,
                params["wk"].astype(jnp.bfloat16), params["bk"].astype(jnp.float32),
                params["wv"].astype(jnp.bfloat16), params["bv"].astype(jnp.float32),
                wo, params["bo"].astype(jnp.float32)]
    # Head-indicator matrices, precomputed once (not rebuilt per grid step).
    E = ((jnp.arange(D, dtype=jnp.int32) // dh)[:, None]
         == jnp.arange(num_heads, dtype=jnp.int32)[None, :]).astype(jnp.float32)
    Et = E.T
    weights = proj + [
        params["g1"].astype(jnp.float32), params["be1"].astype(jnp.float32),
        w1, params["b1"].astype(jnp.float32),
        w2, params["b2"].astype(jnp.float32),
        params["g2"].astype(jnp.float32), params["be2"].astype(jnp.float32),
        E, Et]
    w_bytes = sum(int(w.size) * w.dtype.itemsize for w in weights)

    tb = block_b or _choose_block_b(B, L, D, hidden, x.dtype.itemsize,
                                    x.dtype.itemsize, w_bytes, cfg)
    tb = max(8, (tb // 8) * 8)
    b8 = ((B + 7) // 8) * 8
    tb = min(tb, b8)
    n_blocks = -(-b8 // tb)
    B_pad = n_blocks * tb
    # For B % tb == 0 this is a no-op (no extra HBM pass over x); padded rows
    # (when present) are zero, pass harmlessly through LayerNorm, and are
    # sliced off below.
    x_pad = x if B_pad == B else jnp.pad(x, ((0, B_pad - B), (0, 0), (0, 0)))

    # Advisory cost estimate so XLA schedules neighbors around the custom call.
    mm_flops = 2 * B_pad * (2 * L * D * D               # K, V projections
                            + 2 * D * D                 # Q + output projections
                            + 2 * L * D * num_heads     # score reduce + prob expand
                            + 2 * D * hidden)           # FFN up + down
    ew_flops = B_pad * L * D * 8
    transcendentals = B_pad * (L * num_heads + num_heads + 2)
    bytes_accessed = (x_pad.size * x_pad.dtype.itemsize
                      + B_pad * D * x.dtype.itemsize + w_bytes)
    cost = pl.CostEstimate(flops=int(mm_flops + ew_flops),
                           transcendentals=int(transcendentals),
                           bytes_accessed=int(bytes_accessed))

    kernel = functools.partial(attention_pooling_kernel,
                               num_heads=num_heads, fuse_kv=fuse_kv)

    def make_in_specs(single_buffer_weights):
        specs = [pl.BlockSpec((tb, L, D), lambda b: (b, 0, 0))]
        for w in weights:
            if single_buffer_weights:
                # Constant-index weights are fetched once; one VMEM buffer suffices.
                specs.append(pl.BlockSpec(w.shape, _const_index_map(w.ndim),
                                          pipeline_mode=pl.Buffered(1)))
            else:
                specs.append(pl.BlockSpec(w.shape, _const_index_map(w.ndim)))
        return specs

    def run(single_buffer_weights):
        return pl.pallas_call(
            kernel,
            out_shape=jax.ShapeDtypeStruct((B_pad, D), x.dtype),   # lane-dense 2-D slab
            grid_spec=pltpu.PrefetchScalarGridSpec(
                num_scalar_prefetch=0,
                grid=(n_blocks,),
                in_specs=make_in_specs(single_buffer_weights),
                out_specs=pl.BlockSpec((tb, D), lambda b: (b, 0)),
            ),
            compiler_params=pltpu.CompilerParams(
                dimension_semantics=("parallel",),
                vmem_limit_bytes=cfg["vmem_limit"],
            ),
            cost_estimate=cost,
        )(x_pad, *weights)

    try:
        out2d = run(single_buffer_weights=True)
    except (TypeError, ValueError, NotImplementedError, pltpu.LoweringException):
        # Releases without pipeline_mode=pl.Buffered: fall back to default
        # double buffering of the (small, bf16) weights -- identical numerics.
        # Narrow catch: genuine runtime / VMEM-OOM errors still propagate.
        out2d = run(single_buffer_weights=False)

    return out2d[:B].reshape(B, 1, D)


def reference(x, params, num_heads):
    """Pure-JAX (f32) mirror of the PyTorch forward for verification."""
    B, L, D = x.shape
    dh = D // num_heads
    pooled = jnp.mean(x, axis=1, keepdims=True)                       # (B,1,D)
    q = pooled @ params["wq"] + params["bq"]
    k = x @ params["wk"] + params["bk"]
    v = x @ params["wv"] + params["bv"]
    qh = q.reshape(B, 1, num_heads, dh).transpose(0, 2, 1, 3)
    kh = k.reshape(B, L, num_heads, dh).transpose(0, 2, 1, 3)
    vh = v.reshape(B, L, num_heads, dh).transpose(0, 2, 1, 3)
    s = jnp.einsum("bhqd,bhkd->bhqk", qh, kh) / jnp.sqrt(jnp.float32(dh))
    p = jax.nn.softmax(s, axis=-1)
    o = jnp.einsum("bhqk,bhkd->bhqd", p, vh).transpose(0, 2, 1, 3).reshape(B, 1, D)
    mab = o @ params["wo"] + params["bo"]

    def ln(t, g, b):
        mu = jnp.mean(t, axis=-1, keepdims=True)
        var = jnp.mean((t - mu) ** 2, axis=-1, keepdims=True)
        return (t - mu) * jax.lax.rsqrt(var + EPS) * g + b

    n1 = ln(pooled + mab, params["g1"], params["be1"])
    h1 = jnp.maximum(n1 @ params["w1"] + params["b1"], 0.0)
    f = h1 @ params["w2"] + params["b2"]
    return ln(n1 + f, params["g2"], params["be2"])


def make_params(key, dim, hidden=512):
    ks = jax.random.split(key, 8)

    def lin(k, din, dout, bias_scale=0.01):
        kw, kb = jax.random.split(k)
        w = jax.random.normal(kw, (din, dout), jnp.float32) * 0.1
        b = jax.random.normal(kb, (1, dout), jnp.float32) * bias_scale
        return w, b

    wq, bq = lin(ks[0], dim, dim)
    wk, bk = lin(ks[1], dim, dim)
    wv, bv = lin(ks[2], dim, dim)
    wo, bo = lin(ks[3], dim, dim)
    # FFN (FullyConnectNN): xavier_normal weights, zero bias
    std1 = (2.0 / (dim + hidden)) ** 0.5
    std2 = (2.0 / (hidden + dim)) ** 0.5
    w1 = jax.random.normal(ks[4], (dim, hidden), jnp.float32) * std1
    b1 = jnp.zeros((1, hidden), jnp.float32)
    w2 = jax.random.normal(ks[5], (hidden, dim), jnp.float32) * std2
    b2 = jnp.zeros((1, dim), jnp.float32)
    # LayerNorms: default init (gamma=1, beta=0)
    g1 = jnp.ones((1, dim), jnp.float32)
    be1 = jnp.zeros((1, dim), jnp.float32)
    g2 = jnp.ones((1, dim), jnp.float32)
    be2 = jnp.zeros((1, dim), jnp.float32)
    return dict(wq=wq, bq=bq, wk=wk, bk=bk, wv=wv, bv=bv, wo=wo, bo=bo,
                g1=g1, be1=be1, w1=w1, b1=b1, w2=w2, b2=b2, g2=g2, be2=be2)


if __name__ == "__main__":
    B, L, D, HEADS = 16, 8, 128, 4
    key = jax.random.PRNGKey(0)
    kx, kp = jax.random.split(key)
    x = jax.random.normal(kx, (B, L, D), jnp.float32)
    params = make_params(kp, D)
    # The kernel drives the MXU in bf16; round-trip the matmul weights so the
    # f32 reference sees exactly the same stored weight values.
    for name in ("wq", "wk", "wv", "wo", "w1", "w2"):
        params[name] = params[name].astype(jnp.bfloat16).astype(jnp.float32)

    out = attention_pooling(x, params, HEADS)
    out = jax.block_until_ready(out)

    ref = reference(x, params, HEADS)
    assert out.shape == (B, 1, D)
    err = jnp.max(jnp.abs(out - ref))
    # Remaining intended deviations from the f32 reference: bf16 activation casts
    # on the MXU operands and the approximate EUP reciprocal in the softmax.
    assert jnp.allclose(out, ref, atol=5e-2, rtol=5e-2), f"max err {err}"
    print("KERNEL_OK")
</pallas_src>

<mosaic_0001>
module attributes {stable_mosaic.version = 11 : i64} {
  func.func @attention_pooling_kernel(%arg0: i32, %arg1: memref<8x8x128xf32, #tpu.memory_space<vmem>>, %arg2: memref<128x128xbf16, #tpu.memory_space<vmem>>, %arg3: memref<1x128xf32, #tpu.memory_space<vmem>>, %arg4: memref<128x256xbf16, #tpu.memory_space<vmem>>, %arg5: memref<1x256xf32, #tpu.memory_space<vmem>>, %arg6: memref<128x128xbf16, #tpu.memory_space<vmem>>, %arg7: memref<1x128xf32, #tpu.memory_space<vmem>>, %arg8: memref<1x128xf32, #tpu.memory_space<vmem>>, %arg9: memref<1x128xf32, #tpu.memory_space<vmem>>, %arg10: memref<128x512xbf16, #tpu.memory_space<vmem>>, %arg11: memref<1x512xf32, #tpu.memory_space<vmem>>, %arg12: memref<512x128xbf16, #tpu.memory_space<vmem>>, %arg13: memref<1x128xf32, #tpu.memory_space<vmem>>, %arg14: memref<1x128xf32, #tpu.memory_space<vmem>>, %arg15: memref<1x128xf32, #tpu.memory_space<vmem>>, %arg16: memref<128x4xf32, #tpu.memory_space<vmem>>, %arg17: memref<4x128xf32, #tpu.memory_space<vmem>>, %arg18: memref<8x128xf32, #tpu.memory_space<vmem>>) attributes {dimension_semantics = [#tpu.dimension_semantics<parallel>], iteration_bounds = array<i64: 2>, scalar_prefetch = 0 : i64, scratch_operands = 0 : i64, tpu.core_type = #tpu.core_type<tc>, window_params = [{transform_indices = @transform_0, window_bounds = array<i64: 8, 8, 128>}, {pipeline_mode = #tpu.pipeline_mode<synchronous>, transform_indices = @transform_1, window_bounds = array<i64: 128, 128>}, {pipeline_mode = #tpu.pipeline_mode<synchronous>, transform_indices = @transform_2, window_bounds = array<i64: 1, 128>}, {pipeline_mode = #tpu.pipeline_mode<synchronous>, transform_indices = @transform_3, window_bounds = array<i64: 128, 256>}, {pipeline_mode = #tpu.pipeline_mode<synchronous>, transform_indices = @transform_4, window_bounds = array<i64: 1, 256>}, {pipeline_mode = #tpu.pipeline_mode<synchronous>, transform_indices = @transform_5, window_bounds = array<i64: 128, 128>}, {pipeline_mode = #tpu.pipeline_mode<synchronous>, transform_indices = @transform_6, window_bounds = array<i64: 1, 128>}, {pipeline_mode = #tpu.pipeline_mode<synchronous>, transform_indices = @transform_7, window_bounds = array<i64: 1, 128>}, {pipeline_mode = #tpu.pipeline_mode<synchronous>, transform_indices = @transform_8, window_bounds = array<i64: 1, 128>}, {pipeline_mode = #tpu.pipeline_mode<synchronous>, transform_indices = @transform_9, window_bounds = array<i64: 128, 512>}, {pipeline_mode = #tpu.pipeline_mode<synchronous>, transform_indices = @transform_10, window_bounds = array<i64: 1, 512>}, {pipeline_mode = #tpu.pipeline_mode<synchronous>, transform_indices = @transform_11, window_bounds = array<i64: 512, 128>}, {pipeline_mode = #tpu.pipeline_mode<synchronous>, transform_indices = @transform_12, window_bounds = array<i64: 1, 128>}, {pipeline_mode = #tpu.pipeline_mode<synchronous>, transform_indices = @transform_13, window_bounds = array<i64: 1, 128>}, {pipeline_mode = #tpu.pipeline_mode<synchronous>, transform_indices = @transform_14, window_bounds = array<i64: 1, 128>}, {pipeline_mode = #tpu.pipeline_mode<synchronous>, transform_indices = @transform_15, window_bounds = array<i64: 128, 4>}, {pipeline_mode = #tpu.pipeline_mode<synchronous>, transform_indices = @transform_16, window_bounds = array<i64: 4, 128>}, {transform_indices = @transform_17, window_bounds = array<i64: 8, 128>}]} {
    %c0 = arith.constant 0 : index
    %c0_0 = arith.constant 0 : index
    %c0_1 = arith.constant 0 : index
    %0 = vector.load %arg1[%c0, %c0_0, %c0_1] : memref<8x8x128xf32, #tpu.memory_space<vmem>>, vector<8x8x128xf32>
    %1 = arith.truncf %0 : vector<8x8x128xf32> to vector<8x8x128xbf16>
    %2 = vector.shape_cast %1 : vector<8x8x128xbf16> to vector<64x128xbf16>
    %cst = arith.constant dense<0.000000e+00> : vector<8x128xf32>
    %3 = vector.multi_reduction <add>, %0, %cst [1] : vector<8x8x128xf32> to vector<8x128xf32>
    %cst_2 = arith.constant 8.000000e+00 : f32
    %4 = vector.broadcast %cst_2 : f32 to vector<8x128xf32>
    %5 = arith.divf %3, %4 : vector<8x128xf32>
    %6 = arith.truncf %5 : vector<8x128xf32> to vector<8x128xbf16>
    %c0_3 = arith.constant 0 : index
    %c0_4 = arith.constant 0 : index
    %7 = vector.load %arg2[%c0_3, %c0_4] : memref<128x128xbf16, #tpu.memory_space<vmem>>, vector<128x128xbf16>
    %cst_5 = arith.constant dense<0.000000e+00> : vector<8x128xf32>
    %8 = tpu.matmul %6, %7, %cst_5 {dimension_numbers = #tpu.dot_dimension_numbers<[1], [0], [0], [1], [0, 0, 1, 1], [], []>} : vector<8x128xbf16>, vector<128x128xbf16>, vector<8x128xf32> -> vector<8x128xf32>
    %c0_6 = arith.constant 0 : index
    %c0_7 = arith.constant 0 : index
    %9 = vector.load %arg3[%c0_6, %c0_7] : memref<1x128xf32, #tpu.memory_space<vmem>>, vector<1x128xf32>
    %10 = vector.broadcast %9 : vector<1x128xf32> to vector<8x128xf32>
    %11 = arith.addf %8, %10 : vector<8x128xf32>
    %c0_8 = arith.constant 0 : index
    %c0_9 = arith.constant 0 : index
    %12 = vector.load %arg4[%c0_8, %c0_9] : memref<128x256xbf16, #tpu.memory_space<vmem>>, vector<128x256xbf16>
    %cst_10 = arith.constant dense<0.000000e+00> : vector<64x256xf32>
    %13 = tpu.matmul %2, %12, %cst_10 {dimension_numbers = #tpu.dot_dimension_numbers<[1], [0], [0], [1], [0, 0, 1, 1], [], []>} : vector<64x128xbf16>, vector<128x256xbf16>, vector<64x256xf32> -> vector<64x256xf32>
    %c0_11 = arith.constant 0 : index
    %c0_12 = arith.constant 0 : index
    %14 = vector.load %arg5[%c0_11, %c0_12] : memref<1x256xf32, #tpu.memory_space<vmem>>, vector<1x256xf32>
    %15 = vector.broadcast %14 : vector<1x256xf32> to vector<64x256xf32>
    %16 = arith.addf %13, %15 : vector<64x256xf32>
    %17 = vector.extract_strided_slice %16 {offsets = [0, 0], sizes = [64, 128], strides = [1, 1]} : vector<64x256xf32> to vector<64x128xf32>
    %18 = vector.extract_strided_slice %16 {offsets = [0, 128], sizes = [64, 128], strides = [1, 1]} : vector<64x256xf32> to vector<64x128xf32>
    %19 = vector.shape_cast %17 : vector<64x128xf32> to vector<8x8x128xf32>
    %20 = vector.shape_cast %18 : vector<64x128xf32> to vector<8x8x128xf32>
    %21 = vector.shape_cast %11 : vector<8x128xf32> to vector<8x1x128xf32>
    %22 = vector.broadcast %21 : vector<8x1x128xf32> to vector<8x8x128xf32>
    %23 = arith.mulf %22, %19 : vector<8x8x128xf32>
    %24 = vector.shape_cast %23 : vector<8x8x128xf32> to vector<64x128xf32>
    %c0_13 = arith.constant 0 : index
    %c0_14 = arith.constant 0 : index
    %25 = vector.load %arg16[%c0_13, %c0_14] : memref<128x4xf32, #tpu.memory_space<vmem>>, vector<128x4xf32>
    %cst_15 = arith.constant dense<0.000000e+00> : vector<64x4xf32>
    %26 = tpu.matmul %24, %25, %cst_15 {dimension_numbers = #tpu.dot_dimension_numbers<[1], [0], [0], [1], [0, 0, 1, 1], [], []>} : vector<64x128xf32>, vector<128x4xf32>, vector<64x4xf32> -> vector<64x4xf32>
    %27 = vector.shape_cast %26 : vector<64x4xf32> to vector<8x8x4xf32>
    %cst_16 = arith.constant dense<0xFF800000> : vector<8x4xf32>
    %28 = vector.multi_reduction <maximumf>, %27, %cst_16 [1] : vector<8x8x4xf32> to vector<8x4xf32>
    %29 = vector.shape_cast %28 : vector<8x4xf32> to vector<8x1x4xf32>
    %30 = vector.broadcast %29 : vector<8x1x4xf32> to vector<8x8x4xf32>
    %31 = arith.subf %27, %30 : vector<8x8x4xf32>
    %32 = math.exp %31 : vector<8x8x4xf32>
    %cst_17 = arith.constant dense<0.000000e+00> : vector<8x4xf32>
    %33 = vector.multi_reduction <add>, %32, %cst_17 [1] : vector<8x8x4xf32> to vector<8x4xf32>
    %34 = vector.shape_cast %33 : vector<8x4xf32> to vector<8x1x4xf32>
    %35 = tpu.reciprocal %34 {approx = true} : vector<8x1x4xf32> -> vector<8x1x4xf32>
    %36 = vector.broadcast %35 : vector<8x1x4xf32> to vector<8x8x4xf32>
    %37 = arith.mulf %32, %36 : vector<8x8x4xf32>
    %38 = vector.shape_cast %37 : vector<8x8x4xf32> to vector<64x4xf32>
    %c0_18 = arith.constant 0 : index
    %c0_19 = arith.constant 0 : index
    %39 = vector.load %arg17[%c0_18, %c0_19] : memref<4x128xf32, #tpu.memory_space<vmem>>, vector<4x128xf32>
    %cst_20 = arith.constant dense<0.000000e+00> : vector<64x128xf32>
    %40 = tpu.matmul %38, %39, %cst_20 {dimension_numbers = #tpu.dot_dimension_numbers<[1], [0], [0], [1], [0, 0, 1, 1], [], []>} : vector<64x4xf32>, vector<4x128xf32>, vector<64x128xf32> -> vector<64x128xf32>
    %41 = vector.shape_cast %40 : vector<64x128xf32> to vector<8x8x128xf32>
    %42 = arith.mulf %41, %20 : vector<8x8x128xf32>
    %cst_21 = arith.constant dense<0.000000e+00> : vector<8x128xf32>
    %43 = vector.multi_reduction <add>, %42, %cst_21 [1] : vector<8x8x128xf32> to vector<8x128xf32>
    %44 = arith.truncf %43 : vector<8x128xf32> to vector<8x128xbf16>
    %c0_22 = arith.constant 0 : index
    %c0_23 = arith.constant 0 : index
    %45 = vector.load %arg6[%c0_22, %c0_23] : memref<128x128xbf16, #tpu.memory_space<vmem>>, vector<128x128xbf16>
    %cst_24 = arith.constant dense<0.000000e+00> : vector<8x128xf32>
    %46 = tpu.matmul %44, %45, %cst_24 {dimension_numbers = #tpu.dot_dimension_numbers<[1], [0], [0], [1], [0, 0, 1, 1], [], []>} : vector<8x128xbf16>, vector<128x128xbf16>, vector<8x128xf32> -> vector<8x128xf32>
    %c0_25 = arith.constant 0 : index
    %c0_26 = arith.constant 0 : index
    %47 = vector.load %arg7[%c0_25, %c0_26] : memref<1x128xf32, #tpu.memory_space<vmem>>, vector<1x128xf32>
    %48 = vector.broadcast %47 : vector<1x128xf32> to vector<8x128xf32>
    %49 = arith.addf %46, %48 : vector<8x128xf32>
    %50 = arith.addf %5, %49 : vector<8x128xf32>
    %cst_27 = arith.constant dense<0.000000e+00> : vector<8xf32>
    %51 = vector.multi_reduction <add>, %50, %cst_27 [1] : vector<8x128xf32> to vector<8xf32>
    %52 = vector.shape_cast %51 : vector<8xf32> to vector<8x1xf32>
    %cst_28 = arith.constant 1.280000e+02 : f32
    %53 = vector.broadcast %cst_28 : f32 to vector<8x1xf32>
    %54 = arith.divf %52, %53 : vector<8x1xf32>
    %55 = vector.broadcast %54 : vector<8x1xf32> to vector<8x128xf32>
    %56 = arith.subf %50, %55 : vector<8x128xf32>
    %57 = arith.mulf %56, %56 : vector<8x128xf32>
    %cst_29 = arith.constant dense<0.000000e+00> : vector<8xf32>
    %58 = vector.multi_reduction <add>, %57, %cst_29 [1] : vector<8x128xf32> to vector<8xf32>
    %59 = vector.shape_cast %58 : vector<8xf32> to vector<8x1xf32>
    %cst_30 = arith.constant 1.280000e+02 : f32
    %60 = vector.broadcast %cst_30 : f32 to vector<8x1xf32>
    %61 = arith.divf %59, %60 : vector<8x1xf32>
    %62 = vector.broadcast %54 : vector<8x1xf32> to vector<8x128xf32>
    %63 = arith.subf %50, %62 : vector<8x128xf32>
    %cst_31 = arith.constant 9.99999974E-6 : f32
    %64 = vector.broadcast %cst_31 : f32 to vector<8x1xf32>
    %65 = arith.addf %61, %64 : vector<8x1xf32>
    %66 = math.rsqrt %65 : vector<8x1xf32>
    %67 = vector.broadcast %66 : vector<8x1xf32> to vector<8x128xf32>
    %68 = arith.mulf %63, %67 : vector<8x128xf32>
    %c0_32 = arith.constant 0 : index
    %c0_33 = arith.constant 0 : index
    %69 = vector.load %arg8[%c0_32, %c0_33] : memref<1x128xf32, #tpu.memory_space<vmem>>, vector<1x128xf32>
    %70 = vector.broadcast %69 : vector<1x128xf32> to vector<8x128xf32>
    %71 = arith.mulf %68, %70 : vector<8x128xf32>
    %c0_34 = arith.constant 0 : index
    %c0_35 = arith.constant 0 : index
    %72 = vector.load %arg9[%c0_34, %c0_35] : memref<1x128xf32, #tpu.memory_space<vmem>>, vector<1x128xf32>
    %73 = vector.broadcast %72 : vector<1x128xf32> to vector<8x128xf32>
    %74 = arith.addf %71, %73 : vector<8x128xf32>
    %75 = arith.truncf %74 : vector<8x128xf32> to vector<8x128xbf16>
    %c0_36 = arith.constant 0 : index
    %c0_37 = arith.constant 0 : index
    %76 = vector.load %arg10[%c0_36, %c0_37] : memref<128x512xbf16, #tpu.memory_space<vmem>>, vector<128x512xbf16>
    %cst_38 = arith.constant dense<0.000000e+00> : vector<8x512xf32>
    %77 = tpu.matmul %75, %76, %cst_38 {dimension_numbers = #tpu.dot_dimension_numbers<[1], [0], [0], [1], [0, 0, 1, 1], [], []>} : vector<8x128xbf16>, vector<128x512xbf16>, vector<8x512xf32> -> vector<8x512xf32>
    %c0_39 = arith.constant 0 : index
    %c0_40 = arith.constant 0 : index
    %78 = vector.load %arg11[%c0_39, %c0_40] : memref<1x512xf32, #tpu.memory_space<vmem>>, vector<1x512xf32>
    %79 = vector.broadcast %78 : vector<1x512xf32> to vector<8x512xf32>
    %80 = arith.addf %77, %79 : vector<8x512xf32>
    %cst_41 = arith.constant 0.000000e+00 : f32
    %81 = vector.broadcast %cst_41 : f32 to vector<8x512xf32>
    %82 = arith.maximumf %80, %81 : vector<8x512xf32>
    %83 = arith.truncf %82 : vector<8x512xf32> to vector<8x512xbf16>
    %c0_42 = arith.constant 0 : index
    %c0_43 = arith.constant 0 : index
    %84 = vector.load %arg12[%c0_42, %c0_43] : memref<512x128xbf16, #tpu.memory_space<vmem>>, vector<512x128xbf16>
    %cst_44 = arith.constant dense<0.000000e+00> : vector<8x128xf32>
    %85 = tpu.matmul %83, %84, %cst_44 {dimension_numbers = #tpu.dot_dimension_numbers<[1], [0], [0], [1], [0, 0, 1, 1], [], []>} : vector<8x512xbf16>, vector<512x128xbf16>, vector<8x128xf32> -> vector<8x128xf32>
    %c0_45 = arith.constant 0 : index
    %c0_46 = arith.constant 0 : index
    %86 = vector.load %arg13[%c0_45, %c0_46] : memref<1x128xf32, #tpu.memory_space<vmem>>, vector<1x128xf32>
    %87 = vector.broadcast %86 : vector<1x128xf32> to vector<8x128xf32>
    %88 = arith.addf %85, %87 : vector<8x128xf32>
    %89 = arith.addf %74, %88 : vector<8x128xf32>
    %cst_47 = arith.constant dense<0.000000e+00> : vector<8xf32>
    %90 = vector.multi_reduction <add>, %89, %cst_47 [1] : vector<8x128xf32> to vector<8xf32>
    %91 = vector.shape_cast %90 : vector<8xf32> to vector<8x1xf32>
    %cst_48 = arith.constant 1.280000e+02 : f32
    %92 = vector.broadcast %cst_48 : f32 to vector<8x1xf32>
    %93 = arith.divf %91, %92 : vector<8x1xf32>
    %94 = vector.broadcast %93 : vector<8x1xf32> to vector<8x128xf32>
    %95 = arith.subf %89, %94 : vector<8x128xf32>
    %96 = arith.mulf %95, %95 : vector<8x128xf32>
    %cst_49 = arith.constant dense<0.000000e+00> : vector<8xf32>
    %97 = vector.multi_reduction <add>, %96, %cst_49 [1] : vector<8x128xf32> to vector<8xf32>
    %98 = vector.shape_cast %97 : vector<8xf32> to vector<8x1xf32>
    %cst_50 = arith.constant 1.280000e+02 : f32
    %99 = vector.broadcast %cst_50 : f32 to vector<8x1xf32>
    %100 = arith.divf %98, %99 : vector<8x1xf32>
    %101 = vector.broadcast %93 : vector<8x1xf32> to vector<8x128xf32>
    %102 = arith.subf %89, %101 : vector<8x128xf32>
    %cst_51 = arith.constant 9.99999974E-6 : f32
    %103 = vector.broadcast %cst_51 : f32 to vector<8x1xf32>
    %104 = arith.addf %100, %103 : vector<8x1xf32>
    %105 = math.rsqrt %104 : vector<8x1xf32>
    %106 = vector.broadcast %105 : vector<8x1xf32> to vector<8x128xf32>
    %107 = arith.mulf %102, %106 : vector<8x128xf32>
    %c0_52 = arith.constant 0 : index
    %c0_53 = arith.constant 0 : index
    %108 = vector.load %arg14[%c0_52, %c0_53] : memref<1x128xf32, #tpu.memory_space<vmem>>, vector<1x128xf32>
    %109 = vector.broadcast %108 : vector<1x128xf32> to vector<8x128xf32>
    %110 = arith.mulf %107, %109 : vector<8x128xf32>
    %c0_54 = arith.constant 0 : index
    %c0_55 = arith.constant 0 : index
    %111 = vector.load %arg15[%c0_54, %c0_55] : memref<1x128xf32, #tpu.memory_space<vmem>>, vector<1x128xf32>
    %112 = vector.broadcast %111 : vector<1x128xf32> to vector<8x128xf32>
    %113 = arith.addf %110, %112 : vector<8x128xf32>
    %c0_56 = arith.constant 0 : index
    %c0_57 = arith.constant 0 : index
    %114 = vector.load %arg18[%c0_56, %c0_57] : memref<8x128xf32, #tpu.memory_space<vmem>>, vector<8x128xf32>
    tpu.vector_store %arg18[%c0_56, %c0_57], %113 {strides = array<i32>} : memref<8x128xf32, #tpu.memory_space<vmem>>, vector<8x128xf32>,
    return
  }
  func.func @transform_0(%arg0: i32) -> (i32, i32, i32) {
    %c0_i32 = arith.constant 0 : i32
    %c0_i32_0 = arith.constant 0 : i32
    %c0_i32_1 = arith.constant 0 : i32
    return %arg0, %c0_i32, %c0_i32_0 : i32, i32, i32
  }
  func.func @transform_1(%arg0: i32) -> (i32, i32) {
    %c0_i32 = arith.constant 0 : i32
    %c0_i32_0 = arith.constant 0 : i32
    %c0_i32_1 = arith.constant 0 : i32
    return %c0_i32, %c0_i32_0 : i32, i32
  }
  func.func @transform_2(%arg0: i32) -> (i32, i32) {
    %c0_i32 = arith.constant 0 : i32
    %c0_i32_0 = arith.constant 0 : i32
    %c0_i32_1 = arith.constant 0 : i32
    return %c0_i32, %c0_i32_0 : i32, i32
  }
  func.func @transform_3(%arg0: i32) -> (i32, i32) {
    %c0_i32 = arith.constant 0 : i32
    %c0_i32_0 = arith.constant 0 : i32
    %c0_i32_1 = arith.constant 0 : i32
    return %c0_i32, %c0_i32_0 : i32, i32
  }
  func.func @transform_4(%arg0: i32) -> (i32, i32) {
    %c0_i32 = arith.constant 0 : i32
    %c0_i32_0 = arith.constant 0 : i32
    %c0_i32_1 = arith.constant 0 : i32
    return %c0_i32, %c0_i32_0 : i32, i32
  }
  func.func @transform_5(%arg0: i32) -> (i32, i32) {
    %c0_i32 = arith.constant 0 : i32
    %c0_i32_0 = arith.constant 0 : i32
    %c0_i32_1 = arith.constant 0 : i32
    return %c0_i32, %c0_i32_0 : i32, i32
  }
  func.func @transform_6(%arg0: i32) -> (i32, i32) {
    %c0_i32 = arith.constant 0 : i32
    %c0_i32_0 = arith.constant 0 : i32
    %c0_i32_1 = arith.constant 0 : i32
    return %c0_i32, %c0_i32_0 : i32, i32
  }
  func.func @transform_7(%arg0: i32) -> (i32, i32) {
    %c0_i32 = arith.constant 0 : i32
    %c0_i32_0 = arith.constant 0 : i32
    %c0_i32_1 = arith.constant 0 : i32
    return %c0_i32, %c0_i32_0 : i32, i32
  }
  func.func @transform_8(%arg0: i32) -> (i32, i32) {
    %c0_i32 = arith.constant 0 : i32
    %c0_i32_0 = arith.constant 0 : i32
    %c0_i32_1 = arith.constant 0 : i32
    return %c0_i32, %c0_i32_0 : i32, i32
  }
  func.func @transform_9(%arg0: i32) -> (i32, i32) {
    %c0_i32 = arith.constant 0 : i32
    %c0_i32_0 = arith.constant 0 : i32
    %c0_i32_1 = arith.constant 0 : i32
    return %c0_i32, %c0_i32_0 : i32, i32
  }
  func.func @transform_10(%arg0: i32) -> (i32, i32) {
    %c0_i32 = arith.constant 0 : i32
    %c0_i32_0 = arith.constant 0 : i32
    %c0_i32_1 = arith.constant 0 : i32
    return %c0_i32, %c0_i32_0 : i32, i32
  }
  func.func @transform_11(%arg0: i32) -> (i32, i32) {
    %c0_i32 = arith.constant 0 : i32
    %c0_i32_0 = arith.constant 0 : i32
    %c0_i32_1 = arith.constant 0 : i32
    return %c0_i32, %c0_i32_0 : i32, i32
  }
  func.func @transform_12(%arg0: i32) -> (i32, i32) {
    %c0_i32 = arith.constant 0 : i32
    %c0_i32_0 = arith.constant 0 : i32
    %c0_i32_1 = arith.constant 0 : i32
    return %c0_i32, %c0_i32_0 : i32, i32
  }
  func.func @transform_13(%arg0: i32) -> (i32, i32) {
    %c0_i32 = arith.constant 0 : i32
    %c0_i32_0 = arith.constant 0 : i32
    %c0_i32_1 = arith.constant 0 : i32
    return %c0_i32, %c0_i32_0 : i32, i32
  }
  func.func @transform_14(%arg0: i32) -> (i32, i32) {
    %c0_i32 = arith.constant 0 : i32
    %c0_i32_0 = arith.constant 0 : i32
    %c0_i32_1 = arith.constant 0 : i32
    return %c0_i32, %c0_i32_0 : i32, i32
  }
  func.func @transform_15(%arg0: i32) -> (i32, i32) {
    %c0_i32 = arith.constant 0 : i32
    %c0_i32_0 = arith.constant 0 : i32
    %c0_i32_1 = arith.constant 0 : i32
    return %c0_i32, %c0_i32_0 : i32, i32
  }
  func.func @transform_16(%arg0: i32) -> (i32, i32) {
    %c0_i32 = arith.constant 0 : i32
    %c0_i32_0 = arith.constant 0 : i32
    %c0_i32_1 = arith.constant 0 : i32
    return %c0_i32, %c0_i32_0 : i32, i32
  }
  func.func @transform_17(%arg0: i32) -> (i32, i32) {
    %c0_i32 = arith.constant 0 : i32
    %c0_i32_0 = arith.constant 0 : i32
    return %arg0, %c0_i32 : i32, i32
  }
}

</mosaic_0001>

<llo_original>
// kernel: tpu_custom_call.1
$region0: #{tpu_custom_call.1}
  #allocation0 [shape = 'u32[]', space=smem, size = 0x4, offset = 0x4, fixed_abs, tag = 'smem constant byte address 0x4 - core index']
  #allocation1 [shape = 'u32[72,128]{1,0:T(1,128)}', space=vmem, size = 0x9000, scoped, tag = 'internal scratch']
  %s0 = inlined_call_operand.vmem [shape: f32[16,8,128], index: 0, kind: input, shape index: {}]
  %s1 = inlined_call_operand.hbm [shape: bf16[128,128], index: 1, kind: input, shape index: {}]
  %s2 = inlined_call_operand.vmem [shape: f32[1,128], index: 2, kind: input, shape index: {}]
  %s3 = inlined_call_operand.hbm [shape: bf16[128,256], index: 3, kind: input, shape index: {}]
  %s4 = inlined_call_operand.hbm [shape: f32[1,256], index: 4, kind: input, shape index: {}]
  %s5 = inlined_call_operand.hbm [shape: bf16[128,128], index: 5, kind: input, shape index: {}]
  %s6 = inlined_call_operand.hbm [shape: f32[1,128], index: 6, kind: input, shape index: {}]
  %s7 = inlined_call_operand.hbm [shape: f32[1,128], index: 7, kind: input, shape index: {}]
  %s8 = inlined_call_operand.hbm [shape: f32[1,128], index: 8, kind: input, shape index: {}]
  %s9 = inlined_call_operand.hbm [shape: bf16[128,512], index: 9, kind: input, shape index: {}]
  %s10 = inlined_call_operand.vmem [shape: f32[1,512], index: 10, kind: input, shape index: {}]
  %s11 = inlined_call_operand.hbm [shape: bf16[512,128], index: 11, kind: input, shape index: {}]
  %s12 = inlined_call_operand.vmem [shape: f32[1,128], index: 12, kind: input, shape index: {}]
  %s13 = inlined_call_operand.vmem [shape: f32[1,128], index: 13, kind: input, shape index: {}]
  %s14 = inlined_call_operand.vmem [shape: f32[1,128], index: 14, kind: input, shape index: {}]
  %s15 = inlined_call_operand.vmem [shape: f32[128,4], index: 15, kind: input, shape index: {}]
  %s16 = inlined_call_operand.vmem [shape: f32[4,128], index: 16, kind: input, shape index: {}]
  %s17 = inlined_call_operand.hbm [shape: f32[16,128], index: 17, kind: output, shape index: {}]
  %s18 = sld [smem:[#allocation0]]
  $region137: #{tpu_custom_call.1} parent=0
    _
  %s20 = ssub.s32 1, %s18
  %s21 = scalar_select 0, %s20, %s18
  $region1: #{tpu_custom_call.1} parent=0
    #allocation2 [shape = 'u8[32768]{0}', space=vmem, size = 0x8000, scoped, tag = 'input window, operand 1, single buffered']
    #allocation3 [shape = 's32[2]{0}', space=sflag, size = 0x8, scoped, tag = 'scoped memory for tpu_custom_call.1']
    #allocation4 [shape = 's32[2]{0}', space=sflag, size = 0x8, scoped, tag = 'scoped memory for tpu_custom_call.1']
    #allocation5 [shape = 'u8[65536]{0}', space=vmem, size = 0x10000, scoped, tag = 'input window, operand 3, single buffered']
    #allocation6 [shape = 's32[1]{0}', space=sflag, size = 0x4, scoped, tag = 'scoped memory for tpu_custom_call.1']
    #allocation7 [shape = 'u8[1024]{0}', space=vmem, size = 0x400, scoped, tag = 'input window, operand 4, single buffered']
    #allocation8 [shape = 'u8[32768]{0}', space=vmem, size = 0x8000, scoped, tag = 'input window, operand 5, single buffered']
    #allocation9 [shape = 's32[1]{0}', space=sflag, size = 0x4, scoped, tag = 'scoped memory for tpu_custom_call.1']
    #allocation10 [shape = 'u8[512]{0}', space=vmem, size = 0x400, scoped, tag = 'input window, operand 6, single buffered']
    #allocation11 [shape = 'u8[512]{0}', space=vmem, size = 0x400, scoped, tag = 'input window, operand 7, single buffered']
    #allocation12 [shape = 's32[1]{0}', space=sflag, size = 0x4, scoped, tag = 'scoped memory for tpu_custom_call.1']
    #allocation13 [shape = 'u8[512]{0}', space=vmem, size = 0x400, scoped, tag = 'input window, operand 8, single buffered']
    #allocation14 [shape = 'u8[131072]{0}', space=vmem, size = 0x20000, scoped, tag = 'input window, operand 9, single buffered']
    #allocation15 [shape = 's32[1]{0}', space=sflag, size = 0x4, scoped, tag = 'scoped memory for tpu_custom_call.1']
    #allocation16 [shape = 'u8[131072]{0}', space=vmem, size = 0x20000, scoped, tag = 'input window, operand 11, single buffered']
    #allocation17 [shape = 'u8[8192]{0}', space=vmem, size = 0x2000, scoped, tag = 'output window, operand 0']
    %22 = vsyncpa [#allocation3], 0
    %23 = vsyncpa [#allocation6], 0
    %24 = vsyncpa [#allocation9], 0
    %25 = vsyncpa [#allocation12], 0
    %26 = vsyncpa [#allocation15], 0
    %27 = vsyncpa [#allocation4], 0
    %s28 = scalar_lea.sflag [#allocation4], 1
    %29 = vsyncpa %s28, 0
    loop: start=0, step=1, limit=4
    $region2: #{tpu_custom_call.1} parent=1 // loop_pre_header
      _
    $region3: #{tpu_custom_call.1} parent=1 // loop_header
      %s31 = sphi 0, %s35
      %p32 = scmp.ge.s32.totalorder %s31, 4
      %s41 = sphi 0, %s43
      %s44 = sphi 0, %s41
      %s45 = sphi 0, %s44
      %s61 = sphi 0, %s45
      %s65 = sphi 0, %s65
      %s67 = sphi 0, %s65
      %s68 = sphi 0, %s67
      %s82 = sphi 0, %s68
      %s86 = sphi 0, %s86
      %s88 = sphi 0, %s86
      %s89 = sphi 0, %s88
      %s103 = sphi 0, %s89
      %s107 = sphi 0, %s107
      %s109 = sphi 0, %s107
      %s110 = sphi 0, %s109
      %s124 = sphi 0, %s110
      %s128 = sphi 0, %s128
      %s130 = sphi 0, %s128
      %s131 = sphi 0, %s130
      %s145 = sphi 0, %s131
      %s149 = sphi 0, %s149
      %s151 = sphi 0, %s149
      %s152 = sphi 0, %s151
      %s166 = sphi 0, %s152
      %s170 = sphi 0, %s170
      %s172 = sphi 0, %s170
      %s173 = sphi 0, %s172
      %s187 = sphi 0, %s173
      %s191 = sphi 0, %s191
      %s193 = sphi 0, %s191
      %s194 = sphi 0, %s193
      %s208 = sphi 0, %s194
      %s212 = sphi 0, %s212
      %s214 = sphi 0, %s212
      %s215 = sphi 0, %s214
      %s229 = sphi 0, %s215
      %s233 = sphi 0, %s233
      %s235 = sphi 0, %s233
      %s236 = sphi 0, %s235
      %s250 = sphi 0, %s236
      %s254 = sphi 0, %s254
      %s256 = sphi 0, %s254
      %s257 = sphi 0, %s256
      %s271 = sphi 0, %s257
      %s275 = sphi 0, %s275
      %s277 = sphi 0, %s275
      %s278 = sphi 0, %s277
      %s292 = sphi 0, %s278
      %s296 = sphi 0, %s296
      %s298 = sphi 0, %s296
      %s299 = sphi 0, %s298
      %s313 = sphi 0, %s299
      %s317 = sphi 0, %s317
      %s319 = sphi 0, %s317
      %s320 = sphi 0, %s319
      %s334 = sphi 0, %s320
      %s338 = sphi 0, %s338
      %s340 = sphi 0, %s338
      %s341 = sphi 0, %s340
      %s355 = sphi 0, %s341
      %s359 = sphi 0, %s359
      %s361 = sphi 0, %s359
      %s362 = sphi 0, %s361
      %s376 = sphi 0, %s362
      %s380 = sphi 0, %s380
      %s382 = sphi 0, %s380
      %s383 = sphi 0, %s382
      %s397 = sphi 0, %s383
      %s403 = sphi 0, %s405
      %s406 = sphi 0, %s403
      %s407 = sphi 0, %s406
      %s423 = sphi 0, %s407
    $region4: #{tpu_custom_call.1} parent=1 // loop_header_branch
      %34 = sbr.rel (%p32) target = $region8
    $region5: #{tpu_custom_call.1} parent=1 // loop_body
      %s36 = ssub.s32 %s31, 1
      %s37 = ssub.s32 %s31, 2
      %s38 = sadd.s32 %s31, 1
      %s39 = ssub.s32 %s31, %s38
      %p40 = scmp.eq.s32.totalorder %s39, 0
      %s42 = sadd.s32 %s41, 1
      %s43 = scalar_select %p40, %s41, %s42
      %p46 = pneg %p40
      %p47 = scmp.eq.s32.totalorder %s31, 1
      %p48 = por %p46, %p47
      %p49 = scmp.ne.s32.totalorder %s41, %s44
      %p50 = scmp.eq.s32.totalorder %s31, 0
      %p51 = por %p49, %p50
      %p52 = scmp.ne.s32.totalorder %s41, %s44
      %p53 = scmp.eq.s32.totalorder %s36, 1
      %p54 = por %p52, %p53
      %p55 = scmp.ne.s32.totalorder %s44, %s45
      %p56 = scmp.eq.s32.totalorder %s36, 0
      %p57 = por %p55, %p56
      %p58 = scmp.ne.s32.totalorder %s44, %s45
      %p59 = scmp.eq.s32.totalorder %s37, 1
      %p60 = por %p58, %p59
      %p62 = scmp.ne.s32.totalorder %s45, %s61
      %p63 = scmp.eq.s32.totalorder %s37, 0
      %p64 = por %p62, %p63
      %s66 = sadd.s32 %s65, 1
      %p69 = scmp.eq.s32.totalorder %s31, 1
      %p70 = scmp.ne.s32.totalorder %s65, %s67
      %p71 = scmp.eq.s32.totalorder %s31, 0
      %p72 = por %p70, %p71
      %p73 = scmp.ne.s32.totalorder %s65, %s67
      %p74 = scmp.eq.s32.totalorder %s36, 1
      %p75 = por %p73, %p74
      %p76 = scmp.ne.s32.totalorder %s67, %s68
      %p77 = scmp.eq.s32.totalorder %s36, 0
      %p78 = por %p76, %p77
      %p79 = scmp.ne.s32.totalorder %s67, %s68
      %p80 = scmp.eq.s32.totalorder %s37, 1
      %p81 = por %p79, %p80
      %p83 = scmp.ne.s32.totalorder %s68, %s82
      %p84 = scmp.eq.s32.totalorder %s37, 0
      %p85 = por %p83, %p84
      %s87 = sadd.s32 %s86, 1
      %p90 = scmp.eq.s32.totalorder %s31, 1
      %p91 = scmp.ne.s32.totalorder %s86, %s88
      %p92 = scmp.eq.s32.totalorder %s31, 0
      %p93 = por %p91, %p92
      %p94 = scmp.ne.s32.totalorder %s86, %s88
      %p95 = scmp.eq.s32.totalorder %s36, 1
      %p96 = por %p94, %p95
      %p97 = scmp.ne.s32.totalorder %s88, %s89
      %p98 = scmp.eq.s32.totalorder %s36, 0
      %p99 = por %p97, %p98
      %p100 = scmp.ne.s32.totalorder %s88, %s89
      %p101 = scmp.eq.s32.totalorder %s37, 1
      %p102 = por %p100, %p101
      %p104 = scmp.ne.s32.totalorder %s89, %s103
      %p105 = scmp.eq.s32.totalorder %s37, 0
      %p106 = por %p104, %p105
      %s108 = sadd.s32 %s107, 1
      %p111 = scmp.eq.s32.totalorder %s31, 1
      %p112 = scmp.ne.s32.totalorder %s107, %s109
      %p113 = scmp.eq.s32.totalorder %s31, 0
      %p114 = por %p112, %p113
      %p115 = scmp.ne.s32.totalorder %s107, %s109
      %p116 = scmp.eq.s32.totalorder %s36, 1
      %p117 = por %p115, %p116
      %p118 = scmp.ne.s32.totalorder %s109, %s110
      %p119 = scmp.eq.s32.totalorder %s36, 0
      %p120 = por %p118, %p119
      %p121 = scmp.ne.s32.totalorder %s109, %s110
      %p122 = scmp.eq.s32.totalorder %s37, 1
      %p123 = por %p121, %p122
      %p125 = scmp.ne.s32.totalorder %s110, %s124
      %p126 = scmp.eq.s32.totalorder %s37, 0
      %p127 = por %p125, %p126
      %s129 = sadd.s32 %s128, 1
      %p132 = scmp.eq.s32.totalorder %s31, 1
      %p133 = scmp.ne.s32.totalorder %s128, %s130
      %p134 = scmp.eq.s32.totalorder %s31, 0
      %p135 = por %p133, %p134
      %p136 = scmp.ne.s32.totalorder %s128, %s130
      %p137 = scmp.eq.s32.totalorder %s36, 1
      %p138 = por %p136, %p137
      %p139 = scmp.ne.s32.totalorder %s130, %s131
      %p140 = scmp.eq.s32.totalorder %s36, 0
      %p141 = por %p139, %p140
      %p142 = scmp.ne.s32.totalorder %s130, %s131
      %p143 = scmp.eq.s32.totalorder %s37, 1
      %p144 = por %p142, %p143
      %p146 = scmp.ne.s32.totalorder %s131, %s145
      %p147 = scmp.eq.s32.totalorder %s37, 0
      %p148 = por %p146, %p147
      %s150 = sadd.s32 %s149, 1
      %p153 = scmp.eq.s32.totalorder %s31, 1
      %p154 = scmp.ne.s32.totalorder %s149, %s151
      %p155 = scmp.eq.s32.totalorder %s31, 0
      %p156 = por %p154, %p155
      %p157 = scmp.ne.s32.totalorder %s149, %s151
      %p158 = scmp.eq.s32.totalorder %s36, 1
      %p159 = por %p157, %p158
      %p160 = scmp.ne.s32.totalorder %s151, %s152
      %p161 = scmp.eq.s32.totalorder %s36, 0
      %p162 = por %p160, %p161
      %p163 = scmp.ne.s32.totalorder %s151, %s152
      %p164 = scmp.eq.s32.totalorder %s37, 1
      %p165 = por %p163, %p164
      %p167 = scmp.ne.s32.totalorder %s152, %s166
      %p168 = scmp.eq.s32.totalorder %s37, 0
      %p169 = por %p167, %p168
      %s171 = sadd.s32 %s170, 1
      %p174 = scmp.eq.s32.totalorder %s31, 1
      %p175 = scmp.ne.s32.totalorder %s170, %s172
      %p176 = scmp.eq.s32.totalorder %s31, 0
      %p177 = por %p175, %p176
      %p178 = scmp.ne.s32.totalorder %s170, %s172
      %p179 = scmp.eq.s32.totalorder %s36, 1
      %p180 = por %p178, %p179
      %p181 = scmp.ne.s32.totalorder %s172, %s173
      %p182 = scmp.eq.s32.totalorder %s36, 0
      %p183 = por %p181, %p182
      %p184 = scmp.ne.s32.totalorder %s172, %s173
      %p185 = scmp.eq.s32.totalorder %s37, 1
      %p186 = por %p184, %p185
      %p188 = scmp.ne.s32.totalorder %s173, %s187
      %p189 = scmp.eq.s32.totalorder %s37, 0
      %p190 = por %p188, %p189
      %s192 = sadd.s32 %s191, 1
      %p195 = scmp.eq.s32.totalorder %s31, 1
      %p196 = scmp.ne.s32.totalorder %s191, %s193
      %p197 = scmp.eq.s32.totalorder %s31, 0
      %p198 = por %p196, %p197
      %p199 = scmp.ne.s32.totalorder %s191, %s193
      %p200 = scmp.eq.s32.totalorder %s36, 1
      %p201 = por %p199, %p200
      %p202 = scmp.ne.s32.totalorder %s193, %s194
      %p203 = scmp.eq.s32.totalorder %s36, 0
      %p204 = por %p202, %p203
      %p205 = scmp.ne.s32.totalorder %s193, %s194
      %p206 = scmp.eq.s32.totalorder %s37, 1
      %p207 = por %p205, %p206
      %p209 = scmp.ne.s32.totalorder %s194, %s208
      %p210 = scmp.eq.s32.totalorder %s37, 0
      %p211 = por %p209, %p210
      %s213 = sadd.s32 %s212, 1
      %p216 = scmp.eq.s32.totalorder %s31, 1
      %p217 = scmp.ne.s32.totalorder %s212, %s214
      %p218 = scmp.eq.s32.totalorder %s31, 0
      %p219 = por %p217, %p218
      %p220 = scmp.ne.s32.totalorder %s212, %s214
      %p221 = scmp.eq.s32.totalorder %s36, 1
      %p222 = por %p220, %p221
      %p223 = scmp.ne.s32.totalorder %s214, %s215
      %p224 = scmp.eq.s32.totalorder %s36, 0
      %p225 = por %p223, %p224
      %p226 = scmp.ne.s32.totalorder %s214, %s215
      %p227 = scmp.eq.s32.totalorder %s37, 1
      %p228 = por %p226, %p227
      %p230 = scmp.ne.s32.totalorder %s215, %s229
      %p231 = scmp.eq.s32.totalorder %s37, 0
      %p232 = por %p230, %p231
      %s234 = sadd.s32 %s233, 1
      %p237 = scmp.eq.s32.totalorder %s31, 1
      %p238 = scmp.ne.s32.totalorder %s233, %s235
      %p239 = scmp.eq.s32.totalorder %s31, 0
      %p240 = por %p238, %p239
      %p241 = scmp.ne.s32.totalorder %s233, %s235
      %p242 = scmp.eq.s32.totalorder %s36, 1
      %p243 = por %p241, %p242
      %p244 = scmp.ne.s32.totalorder %s235, %s236
      %p245 = scmp.eq.s32.totalorder %s36, 0
      %p246 = por %p244, %p245
      %p247 = scmp.ne.s32.totalorder %s235, %s236
      %p248 = scmp.eq.s32.totalorder %s37, 1
      %p249 = por %p247, %p248
      %p251 = scmp.ne.s32.totalorder %s236, %s250
      %p252 = scmp.eq.s32.totalorder %s37, 0
      %p253 = por %p251, %p252
      %s255 = sadd.s32 %s254, 1
      %p258 = scmp.eq.s32.totalorder %s31, 1
      %p259 = scmp.ne.s32.totalorder %s254, %s256
      %p260 = scmp.eq.s32.totalorder %s31, 0
      %p261 = por %p259, %p260
      %p262 = scmp.ne.s32.totalorder %s254, %s256
      %p263 = scmp.eq.s32.totalorder %s36, 1
      %p264 = por %p262, %p263
      %p265 = scmp.ne.s32.totalorder %s256, %s257
      %p266 = scmp.eq.s32.totalorder %s36, 0
      %p267 = por %p265, %p266
      %p268 = scmp.ne.s32.totalorder %s256, %s257
      %p269 = scmp.eq.s32.totalorder %s37, 1
      %p270 = por %p268, %p269
      %p272 = scmp.ne.s32.totalorder %s257, %s271
      %p273 = scmp.eq.s32.totalorder %s37, 0
      %p274 = por %p272, %p273
      %s276 = sadd.s32 %s275, 1
      %p279 = scmp.eq.s32.totalorder %s31, 1
      %p280 = scmp.ne.s32.totalorder %s275, %s277
      %p281 = scmp.eq.s32.totalorder %s31, 0
      %p282 = por %p280, %p281
      %p283 = scmp.ne.s32.totalorder %s275, %s277
      %p284 = scmp.eq.s32.totalorder %s36, 1
      %p285 = por %p283, %p284
      %p286 = scmp.ne.s32.totalorder %s277, %s278
      %p287 = scmp.eq.s32.totalorder %s36, 0
      %p288 = por %p286, %p287
      %p289 = scmp.ne.s32.totalorder %s277, %s278
      %p290 = scmp.eq.s32.totalorder %s37, 1
      %p291 = por %p289, %p290
      %p293 = scmp.ne.s32.totalorder %s278, %s292
      %p294 = scmp.eq.s32.totalorder %s37, 0
      %p295 = por %p293, %p294
      %s297 = sadd.s32 %s296, 1
      %p300 = scmp.eq.s32.totalorder %s31, 1
      %p301 = scmp.ne.s32.totalorder %s296, %s298
      %p302 = scmp.eq.s32.totalorder %s31, 0
      %p303 = por %p301, %p302
      %p304 = scmp.ne.s32.totalorder %s296, %s298
      %p305 = scmp.eq.s32.totalorder %s36, 1
      %p306 = por %p304, %p305
      %p307 = scmp.ne.s32.totalorder %s298, %s299
      %p308 = scmp.eq.s32.totalorder %s36, 0
      %p309 = por %p307, %p308
      %p310 = scmp.ne.s32.totalorder %s298, %s299
      %p311 = scmp.eq.s32.totalorder %s37, 1
      %p312 = por %p310, %p311
      %p314 = scmp.ne.s32.totalorder %s299, %s313
      %p315 = scmp.eq.s32.totalorder %s37, 0
      %p316 = por %p314, %p315
      %s318 = sadd.s32 %s317, 1
      %p321 = scmp.eq.s32.totalorder %s31, 1
      %p322 = scmp.ne.s32.totalorder %s317, %s319
      %p323 = scmp.eq.s32.totalorder %s31, 0
      %p324 = por %p322, %p323
      %p325 = scmp.ne.s32.totalorder %s317, %s319
      %p326 = scmp.eq.s32.totalorder %s36, 1
      %p327 = por %p325, %p326
      %p328 = scmp.ne.s32.totalorder %s319, %s320
      %p329 = scmp.eq.s32.totalorder %s36, 0
      %p330 = por %p328, %p329
      %p331 = scmp.ne.s32.totalorder %s319, %s320
      %p332 = scmp.eq.s32.totalorder %s37, 1
      %p333 = por %p331, %p332
      %p335 = scmp.ne.s32.totalorder %s320, %s334
      %p336 = scmp.eq.s32.totalorder %s37, 0
      %p337 = por %p335, %p336
      %s339 = sadd.s32 %s338, 1
      %p342 = scmp.eq.s32.totalorder %s31, 1
      %p343 = scmp.ne.s32.totalorder %s338, %s340
      %p344 = scmp.eq.s32.totalorder %s31, 0
      %p345 = por %p343, %p344
      %p346 = scmp.ne.s32.totalorder %s338, %s340
      %p347 = scmp.eq.s32.totalorder %s36, 1
      %p348 = por %p346, %p347
      %p349 = scmp.ne.s32.totalorder %s340, %s341
      %p350 = scmp.eq.s32.totalorder %s36, 0
      %p351 = por %p349, %p350
      %p352 = scmp.ne.s32.totalorder %s340, %s341
      %p353 = scmp.eq.s32.totalorder %s37, 1
      %p354 = por %p352, %p353
      %p356 = scmp.ne.s32.totalorder %s341, %s355
      %p357 = scmp.eq.s32.totalorder %s37, 0
      %p358 = por %p356, %p357
      %s360 = sadd.s32 %s359, 1
      %p363 = scmp.eq.s32.totalorder %s31, 1
      %p364 = scmp.ne.s32.totalorder %s359, %s361
      %p365 = scmp.eq.s32.totalorder %s31, 0
      %p366 = por %p364, %p365
      %p367 = scmp.ne.s32.totalorder %s359, %s361
      %p368 = scmp.eq.s32.totalorder %s36, 1
      %p369 = por %p367, %p368
      %p370 = scmp.ne.s32.totalorder %s361, %s362
      %p371 = scmp.eq.s32.totalorder %s36, 0
      %p372 = por %p370, %p371
      %p373 = scmp.ne.s32.totalorder %s361, %s362
      %p374 = scmp.eq.s32.totalorder %s37, 1
      %p375 = por %p373, %p374
      %p377 = scmp.ne.s32.totalorder %s362, %s376
      %p378 = scmp.eq.s32.totalorder %s37, 0
      %p379 = por %p377, %p378
      %s381 = sadd.s32 %s380, 1
      %p384 = scmp.eq.s32.totalorder %s31, 1
      %p385 = scmp.ne.s32.totalorder %s380, %s382
      %p386 = scmp.eq.s32.totalorder %s31, 0
      %p387 = por %p385, %p386
      %p388 = scmp.ne.s32.totalorder %s380, %s382
      %p389 = scmp.eq.s32.totalorder %s36, 1
      %p390 = por %p388, %p389
      %p391 = scmp.ne.s32.totalorder %s382, %s383
      %p392 = scmp.eq.s32.totalorder %s36, 0
      %p393 = por %p391, %p392
      %p394 = scmp.ne.s32.totalorder %s382, %s383
      %p395 = scmp.eq.s32.totalorder %s37, 1
      %p396 = por %p394, %p395
      %p398 = scmp.ne.s32.totalorder %s383, %s397
      %p399 = scmp.eq.s32.totalorder %s37, 0
      %p400 = por %p398, %p399
      %s401 = ssub.s32 %s31, %s38
      %p402 = scmp.eq.s32.totalorder %s401, 0
      %s404 = sadd.s32 %s403, 1
      %s405 = scalar_select %p402, %s403, %s404
      %p408 = pneg %p402
      %p409 = scmp.eq.s32.totalorder %s31, 1
      %p410 = por %p408, %p409
      %p411 = scmp.ne.s32.totalorder %s403, %s406
      %p412 = scmp.eq.s32.totalorder %s31, 0
      %p413 = por %p411, %p412
      %p414 = scmp.ne.s32.totalorder %s403, %s406
      %p415 = scmp.eq.s32.totalorder %s36, 1
      %p416 = por %p414, %p415
      %p417 = scmp.ne.s32.totalorder %s406, %s407
      %p418 = scmp.eq.s32.totalorder %s36, 0
      %p419 = por %p417, %p418
      %p420 = scmp.ne.s32.totalorder %s406, %s407
      %p421 = scmp.eq.s32.totalorder %s37, 1
      %p422 = por %p420, %p421
      %p424 = scmp.ne.s32.totalorder %s407, %s423
      %p425 = scmp.eq.s32.totalorder %s37, 0
      %p426 = por %p424, %p425
      %p427 = scmp.le.s32.totalorder 1, %s31
      %p428 = scmp.lt.s32.totalorder %s31, 3
      %p429 = pnand %p427, %p428
      %p430 = pneg %p429
      // Predicated region
      $region9: #{tpu_custom_call.1} parent=5 // pred_check
        _
      $region10: #{tpu_custom_call.1} parent=5 // pred_check_branch
        %432 = sbr.rel (%p429) target = $region12
      $region11: #{tpu_custom_call.1} parent=5 // pred_region
        %s433 = ssub.s32 %s31, 1
        // Predicated region
        $region13: #{tpu_custom_call.1} parent=11 // pred_check
          %p434 = pneg %p78
        $region14: #{tpu_custom_call.1} parent=11 // pred_check_branch
          %436 = sbr.rel (%p434) target = $region16
        $region15: #{tpu_custom_call.1} parent=11 // pred_region
          %438 = vsyncadd [#allocation3], 0
          %s439 = sshll.u32 %s1, 4
          %s440 = int_to_ptr.hbm [resolvable:$true] %s439
          %s441 = sshll.u32 [#allocation2], 4
          %s442 = int_to_ptr.vmem [resolvable:$true] %s441
          %447 = dma.hbm_to_vmem [thread:$0]  %s440, 1024, %s442, [#allocation3], 64, 64, 4
        $region16: #{tpu_custom_call.1} parent=11 // pred_fallthru
          _
        // Predicated region
        $region17: #{tpu_custom_call.1} parent=11 // pred_check
          %p448 = pneg %p99
        $region18: #{tpu_custom_call.1} parent=11 // pred_check_branch
          %450 = sbr.rel (%p448) target = $region20
        $region19: #{tpu_custom_call.1} parent=11 // pred_region
          _
        $region20: #{tpu_custom_call.1} parent=11 // pred_fallthru
          _
        // Predicated region
        $region21: #{tpu_custom_call.1} parent=11 // pred_check
          %p451 = pneg %p120
        $region22: #{tpu_custom_call.1} parent=11 // pred_check_branch
          %453 = sbr.rel (%p451) target = $region24
        $region23: #{tpu_custom_call.1} parent=11 // pred_region
          %455 = vsyncadd [#allocation6], 0
          %s456 = sshll.u32 %s3, 4
          %s457 = int_to_ptr.hbm [resolvable:$true] %s456
          %s458 = sshll.u32 [#allocation5], 4
          %s459 = int_to_ptr.vmem [resolvable:$true] %s458
          %464 = dma.hbm_to_vmem [thread:$0]  %s457, 2048, %s459, [#allocation6], 128, 128, 8
        $region24: #{tpu_custom_call.1} parent=11 // pred_fallthru
          _
        // Predicated region
        $region25: #{tpu_custom_call.1} parent=11 // pred_check
          %p465 = pneg %p141
        $region26: #{tpu_custom_call.1} parent=11 // pred_check_branch
          %467 = sbr.rel (%p465) target = $region28
        $region27: #{tpu_custom_call.1} parent=11 // pred_region
          %469 = vsyncadd [#allocation6], 0
          %s471 = sshll.u32 %s4, 4
          %s472 = int_to_ptr.hbm [resolvable:$true] %s471
          %s473 = sshll.u32 [#allocation7], 4
          %s474 = int_to_ptr.vmem [resolvable:$true] %s473
          %476 = dma.hbm_to_vmem [thread:$0]  %s472, 32, %s474, [#allocation6]
        $region28: #{tpu_custom_call.1} parent=11 // pred_fallthru
          _
        // Predicated region
        $region29: #{tpu_custom_call.1} parent=11 // pred_check
          %p477 = pneg %p162
        $region30: #{tpu_custom_call.1} parent=11 // pred_check_branch
          %479 = sbr.rel (%p477) target = $region32
        $region31: #{tpu_custom_call.1} parent=11 // pred_region
          %481 = vsyncadd [#allocation9], 0
          %s482 = sshll.u32 %s5, 4
          %s483 = int_to_ptr.hbm [resolvable:$true] %s482
          %s484 = sshll.u32 [#allocation8], 4
          %s485 = int_to_ptr.vmem [resolvable:$true] %s484
          %490 = dma.hbm_to_vmem [thread:$0]  %s483, 1024, %s485, [#allocation9], 64, 64, 4
        $region32: #{tpu_custom_call.1} parent=11 // pred_fallthru
          _
        // Predicated region
        $region33: #{tpu_custom_call.1} parent=11 // pred_check
          %p491 = pneg %p183
        $region34: #{tpu_custom_call.1} parent=11 // pred_check_branch
          %493 = sbr.rel (%p491) target = $region36
        $region35: #{tpu_custom_call.1} parent=11 // pred_region
          %495 = vsyncadd [#allocation9], 0
          %s497 = sshll.u32 %s6, 4
          %s498 = int_to_ptr.hbm [resolvable:$true] %s497
          %s499 = sshll.u32 [#allocation10], 4
          %s500 = int_to_ptr.vmem [resolvable:$true] %s499
          %502 = dma.hbm_to_vmem [thread:$0]  %s498, 16, %s500, [#allocation9]
        $region36: #{tpu_custom_call.1} parent=11 // pred_fallthru
          _
        // Predicated region
        $region37: #{tpu_custom_call.1} parent=11 // pred_check
          %p503 = pneg %p204
        $region38: #{tpu_custom_call.1} parent=11 // pred_check_branch
          %505 = sbr.rel (%p503) target = $region40
        $region39: #{tpu_custom_call.1} parent=11 // pred_region
          %507 = vsyncadd [#allocation12], 0
          %s509 = sshll.u32 %s7, 4
          %s510 = int_to_ptr.hbm [resolvable:$true] %s509
          %s511 = sshll.u32 [#allocation11], 4
          %s512 = int_to_ptr.vmem [resolvable:$true] %s511
          %514 = dma.hbm_to_vmem [thread:$0]  %s510, 16, %s512, [#allocation12]
        $region40: #{tpu_custom_call.1} parent=11 // pred_fallthru
          _
        // Predicated region
        $region41: #{tpu_custom_call.1} parent=11 // pred_check
          %p515 = pneg %p225
        $region42: #{tpu_custom_call.1} parent=11 // pred_check_branch
          %517 = sbr.rel (%p515) target = $region44
        $region43: #{tpu_custom_call.1} parent=11 // pred_region
          %519 = vsyncadd [#allocation12], 0
          %s521 = sshll.u32 %s8, 4
          %s522 = int_to_ptr.hbm [resolvable:$true] %s521
          %s523 = sshll.u32 [#allocation13], 4
          %s524 = int_to_ptr.vmem [resolvable:$true] %s523
          %526 = dma.hbm_to_vmem [thread:$0]  %s522, 16, %s524, [#allocation12]
        $region44: #{tpu_custom_call.1} parent=11 // pred_fallthru
          _
        // Predicated region
        $region45: #{tpu_custom_call.1} parent=11 // pred_check
          %p527 = pneg %p246
        $region46: #{tpu_custom_call.1} parent=11 // pred_check_branch
          %529 = sbr.rel (%p527) target = $region48
        $region47: #{tpu_custom_call.1} parent=11 // pred_region
          %531 = vsyncadd [#allocation15], 0
          %s532 = sshll.u32 %s9, 4
          %s533 = int_to_ptr.hbm [resolvable:$true] %s532
          %s534 = sshll.u32 [#allocation14], 4
          %s535 = int_to_ptr.vmem [resolvable:$true] %s534
          %540 = dma.hbm_to_vmem [thread:$0]  %s533, 4096, %s535, [#allocation15], 256, 256, 16
        $region48: #{tpu_custom_call.1} parent=11 // pred_fallthru
          _
        // Predicated region
        $region49: #{tpu_custom_call.1} parent=11 // pred_check
          %p541 = pneg %p267
        $region50: #{tpu_custom_call.1} parent=11 // pred_check_branch
          %543 = sbr.rel (%p541) target = $region52
        $region51: #{tpu_custom_call.1} parent=11 // pred_region
          _
        $region52: #{tpu_custom_call.1} parent=11 // pred_fallthru
          _
        // Predicated region
        $region53: #{tpu_custom_call.1} parent=11 // pred_check
          %p544 = pneg %p288
        $region54: #{tpu_custom_call.1} parent=11 // pred_check_branch
          %546 = sbr.rel (%p544) target = $region56
        $region55: #{tpu_custom_call.1} parent=11 // pred_region
          %548 = vsyncadd [#allocation15], 0
          %s549 = sshll.u32 %s11, 4
          %s550 = int_to_ptr.hbm [resolvable:$true] %s549
          %s551 = sshll.u32 [#allocation16], 4
          %s552 = int_to_ptr.vmem [resolvable:$true] %s551
          %557 = dma.hbm_to_vmem [thread:$0]  %s550, 4096, %s552, [#allocation15], 64, 64, 4
        $region56: #{tpu_custom_call.1} parent=11 // pred_fallthru
          _
        // Predicated region
        $region57: #{tpu_custom_call.1} parent=11 // pred_check
          %p558 = pneg %p309
        $region58: #{tpu_custom_call.1} parent=11 // pred_check_branch
          %560 = sbr.rel (%p558) target = $region60
        $region59: #{tpu_custom_call.1} parent=11 // pred_region
          _
        $region60: #{tpu_custom_call.1} parent=11 // pred_fallthru
          _
        // Predicated region
        $region61: #{tpu_custom_call.1} parent=11 // pred_check
          %p561 = pneg %p330
        $region62: #{tpu_custom_call.1} parent=11 // pred_check_branch
          %563 = sbr.rel (%p561) target = $region64
        $region63: #{tpu_custom_call.1} parent=11 // pred_region
          _
        $region64: #{tpu_custom_call.1} parent=11 // pred_fallthru
          _
        // Predicated region
        $region65: #{tpu_custom_call.1} parent=11 // pred_check
          %p564 = pneg %p351
        $region66: #{tpu_custom_call.1} parent=11 // pred_check_branch
          %566 = sbr.rel (%p564) target = $region68
        $region67: #{tpu_custom_call.1} parent=11 // pred_region
          _
        $region68: #{tpu_custom_call.1} parent=11 // pred_fallthru
          _
        // Predicated region
        $region69: #{tpu_custom_call.1} parent=11 // pred_check
          %p567 = pneg %p372
        $region70: #{tpu_custom_call.1} parent=11 // pred_check_branch
          %569 = sbr.rel (%p567) target = $region72
        $region71: #{tpu_custom_call.1} parent=11 // pred_region
          _
        $region72: #{tpu_custom_call.1} parent=11 // pred_fallthru
          _
        // Predicated region
        $region73: #{tpu_custom_call.1} parent=11 // pred_check
          %p570 = pneg %p393
        $region74: #{tpu_custom_call.1} parent=11 // pred_check_branch
          %572 = sbr.rel (%p570) target = $region76
        $region75: #{tpu_custom_call.1} parent=11 // pred_region
          _
        $region76: #{tpu_custom_call.1} parent=11 // pred_fallthru
          _
      $region12: #{tpu_custom_call.1} parent=5 // pred_fallthru
        _
      %p573 = scmp.lt.s32.totalorder %s31, 2
      // Predicated region
      $region77: #{tpu_custom_call.1} parent=5 // pred_check
        %p574 = pneg %p573
      $region78: #{tpu_custom_call.1} parent=5 // pred_check_branch
        %576 = sbr.rel (%p574) target = $region80
      $region79: #{tpu_custom_call.1} parent=5 // pred_region
        // Predicated region
        $region81: #{tpu_custom_call.1} parent=79 // pred_check
          %p577 = pneg %p51
        $region82: #{tpu_custom_call.1} parent=79 // pred_check_branch
          %579 = sbr.rel (%p577) target = $region84
        $region83: #{tpu_custom_call.1} parent=79 // pred_region
          %s580 = smul.u32 8, %s31
          %p581 = scmp.lt.s32.totalorder %s580, 15
          %s582 = scalar_select %p581, %s580, 15
          %s583 = smul.addr %s582, 8
          %s584 = scalar_lea.vmem %s0, %s583
          %s585 = smul.u32 8, %s31
        $region84: #{tpu_custom_call.1} parent=79 // pred_fallthru
          _
      $region80: #{tpu_custom_call.1} parent=5 // pred_fallthru
        _
      %p586 = scmp.le.s32.totalorder 1, %s31
      %p587 = scmp.lt.s32.totalorder %s31, 3
      %p588 = pnand %p586, %p587
      %p589 = pneg %p588
      // Predicated region
      $region85: #{tpu_custom_call.1} parent=5 // pred_check
        _
      $region86: #{tpu_custom_call.1} parent=5 // pred_check_branch
        %591 = sbr.rel (%p588) target = $region88
      $region87: #{tpu_custom_call.1} parent=5 // pred_region
        %s592 = ssub.s32 %s31, 1
        // Predicated region
        $region89: #{tpu_custom_call.1} parent=87 // pred_check
          %p593 = pneg %p78
        $region90: #{tpu_custom_call.1} parent=87 // pred_check_branch
          %595 = sbr.rel (%p593) target = $region92
        $region91: #{tpu_custom_call.1} parent=87 // pred_region
          %597 = dma.done [#allocation3], 1024
        $region92: #{tpu_custom_call.1} parent=87 // pred_fallthru
          _
        // Predicated region
        $region93: #{tpu_custom_call.1} parent=87 // pred_check
          %p598 = pneg %p120
        $region94: #{tpu_custom_call.1} parent=87 // pred_check_branch
          %600 = sbr.rel (%p598) target = $region96
        $region95: #{tpu_custom_call.1} parent=87 // pred_region
          %602 = dma.done [#allocation6], 2048
        $region96: #{tpu_custom_call.1} parent=87 // pred_fallthru
          _
        // Predicated region
        $region97: #{tpu_custom_call.1} parent=87 // pred_check
          %p603 = pneg %p141
        $region98: #{tpu_custom_call.1} parent=87 // pred_check_branch
          %605 = sbr.rel (%p603) target = $region100
        $region99: #{tpu_custom_call.1} parent=87 // pred_region
          %607 = dma.done [#allocation6], 32
        $region100: #{tpu_custom_call.1} parent=87 // pred_fallthru
          _
        // Predicated region
        $region101: #{tpu_custom_call.1} parent=87 // pred_check
          %p608 = pneg %p162
        $region102: #{tpu_custom_call.1} parent=87 // pred_check_branch
          %610 = sbr.rel (%p608) target = $region104
        $region103: #{tpu_custom_call.1} parent=87 // pred_region
          %612 = dma.done [#allocation9], 1024
        $region104: #{tpu_custom_call.1} parent=87 // pred_fallthru
          _
        // Predicated region
        $region105: #{tpu_custom_call.1} parent=87 // pred_check
          %p613 = pneg %p183
        $region106: #{tpu_custom_call.1} parent=87 // pred_check_branch
          %615 = sbr.rel (%p613) target = $region108
        $region107: #{tpu_custom_call.1} parent=87 // pred_region
          %617 = dma.done [#allocation9], 16
        $region108: #{tpu_custom_call.1} parent=87 // pred_fallthru
          _
        // Predicated region
        $region109: #{tpu_custom_call.1} parent=87 // pred_check
          %p618 = pneg %p204
        $region110: #{tpu_custom_call.1} parent=87 // pred_check_branch
          %620 = sbr.rel (%p618) target = $region112
        $region111: #{tpu_custom_call.1} parent=87 // pred_region
          %622 = dma.done [#allocation12], 16
        $region112: #{tpu_custom_call.1} parent=87 // pred_fallthru
          _
        // Predicated region
        $region113: #{tpu_custom_call.1} parent=87 // pred_check
          %p623 = pneg %p225
        $region114: #{tpu_custom_call.1} parent=87 // pred_check_branch
          %625 = sbr.rel (%p623) target = $region116
        $region115: #{tpu_custom_call.1} parent=87 // pred_region
          %627 = dma.done [#allocation12], 16
        $region116: #{tpu_custom_call.1} parent=87 // pred_fallthru
          _
        // Predicated region
        $region117: #{tpu_custom_call.1} parent=87 // pred_check
          %p628 = pneg %p246
        $region118: #{tpu_custom_call.1} parent=87 // pred_check_branch
          %630 = sbr.rel (%p628) target = $region120
        $region119: #{tpu_custom_call.1} parent=87 // pred_region
          %632 = dma.done [#allocation15], 4096
        $region120: #{tpu_custom_call.1} parent=87 // pred_fallthru
          _
        // Predicated region
        $region121: #{tpu_custom_call.1} parent=87 // pred_check
          %p633 = pneg %p288
        $region122: #{tpu_custom_call.1} parent=87 // pred_check_branch
          %635 = sbr.rel (%p633) target = $region124
        $region123: #{tpu_custom_call.1} parent=87 // pred_region
          %637 = dma.done [#allocation15], 4096
        $region124: #{tpu_custom_call.1} parent=87 // pred_fallthru
          _
        %s638 = smul.u32 8, %s36
        %p639 = scmp.lt.s32.totalorder %s638, 15
        %s640 = scalar_select %p639, %s638, 15
        %s641 = smul.addr %s640, 8
        %s642 = scalar_lea.vmem %s0, %s641
        %p643 = pneg %p57
        %p644 = pneg %p54
        %p645 = pneg %p78
        %p646 = pneg %p75
        %p647 = pneg %p99
        %p648 = pneg %p96
        %p649 = pneg %p120
        %p650 = pneg %p117
        %p651 = pneg %p141
        %p652 = pneg %p138
        %p653 = pneg %p162
        %p654 = pneg %p159
        %p655 = pneg %p183
        %p656 = pneg %p180
        %p657 = pneg %p204
        %p658 = pneg %p201
        %p659 = pneg %p225
        %p660 = pneg %p222
        %p661 = pneg %p246
        %p662 = pneg %p243
        %p663 = pneg %p267
        %p664 = pneg %p264
        %p665 = pneg %p288
        %p666 = pneg %p285
        %p667 = pneg %p309
        %p668 = pneg %p306
        %p669 = pneg %p330
        %p670 = pneg %p327
        %p671 = pneg %p351
        %p672 = pneg %p348
        %p673 = pneg %p372
        %p674 = pneg %p369
        %p675 = pneg %p393
        %p676 = pneg %p390
        %p677 = pneg %p419
        %p678 = pneg %p416
        %s679 = sand.u32 %s406, 1
        %s680 = scalar_lea.sflag [#allocation4], %s679
        %s681 = sand.u32 %s406, 1
        %s682 = smul.addr %s681, 8
        %s683 = scalar_lea.vmem [#allocation17], %s682
        %s684 = smul.u32 8, %s36
        %p685 = scmp.lt.s32.totalorder %s684, 15
        %s686 = scalar_select %p685, %s684, 15
        %s687 = smul.addr %s686, 8
        %s688 = scalar_lea.vmem %s0, %s687
        %s689 = smul.u32 8, %s36
        %v690 = vld [vmem:[%s688] sm:$0xff]
        %v691 = vld [vmem:[%s688 + $0x8] sm:$0xff]
        %v692 = vld [vmem:[%s688 + $0x10] sm:$0xff]
        %v693 = vld [vmem:[%s688 + $0x18] sm:$0xff]
        %v694 = vld [vmem:[%s688 + $0x20] sm:$0xff]
        %v695 = vld [vmem:[%s688 + $0x28] sm:$0xff]
        %v696 = vld [vmem:[%s688 + $0x30] sm:$0xff]
        %v697 = vld [vmem:[%s688 + $0x38] sm:$0xff]
        %v698 = vpack.c.bf16 %v690, %v690
        %v699 = vpack.c.bf16 %v691, %v691
        %v700 = vpack.c.bf16 %v692, %v692
        %v701 = vpack.c.bf16 %v693, %v693
        %v702 = vpack.c.bf16 %v694, %v694
        %v703 = vpack.c.bf16 %v695, %v695
        %v704 = vpack.c.bf16 %v696, %v696
        %v705 = vpack.c.bf16 %v697, %v697
        %v706 = vrot.slane %v690, 4
        %v707 = vadd.f32 %v690, %v706
        %v708 = vrot.slane %v707, 2
        %v709 = vadd.f32 %v707, %v708
        %v710 = vrot.slane %v709, 1
        %v711 = vadd.f32 %v709, %v710
        %v712 = vrot.slane %v691, 4
        %v713 = vadd.f32 %v691, %v712
        %v714 = vrot.slane %v713, 2
        %v715 = vadd.f32 %v713, %v714
        %v716 = vrot.slane %v715, 1
        %v717 = vadd.f32 %v715, %v716
        %v718 = vrot.slane %v692, 4
        %v719 = vadd.f32 %v692, %v718
        %v720 = vrot.slane %v719, 2
        %v721 = vadd.f32 %v719, %v720
        %v722 = vrot.slane %v721, 1
        %v723 = vadd.f32 %v721, %v722
        %v724 = vrot.slane %v693, 4
        %v725 = vadd.f32 %v693, %v724
        %v726 = vrot.slane %v725, 2
        %v727 = vadd.f32 %v725, %v726
        %v728 = vrot.slane %v727, 1
        %v729 = vadd.f32 %v727, %v728
        %v730 = vrot.slane %v694, 4
        %v731 = vadd.f32 %v694, %v730
        %v732 = vrot.slane %v731, 2
        %v733 = vadd.f32 %v731, %v732
        %v734 = vrot.slane %v733, 1
        %v735 = vadd.f32 %v733, %v734
        %v736 = vrot.slane %v695, 4
        %v737 = vadd.f32 %v695, %v736
        %v738 = vrot.slane %v737, 2
        %v739 = vadd.f32 %v737, %v738
        %v740 = vrot.slane %v739, 1
        %v741 = vadd.f32 %v739, %v740
        %v742 = vrot.slane %v696, 4
        %v743 = vadd.f32 %v696, %v742
        %v744 = vrot.slane %v743, 2
        %v745 = vadd.f32 %v743, %v744
        %v746 = vrot.slane %v745, 1
        %v747 = vadd.f32 %v745, %v746
        %v748 = vrot.slane %v697, 4
        %v749 = vadd.f32 %v697, %v748
        %v750 = vrot.slane %v749, 2
        %v751 = vadd.f32 %v749, %v750
        %v752 = vrot.slane %v751, 1
        %v753 = vadd.f32 %v751, %v752
        %v754 = vrcp.pop 8.0
        %v755 = vmul.f32 8.0, %v754
        %v756 = vsub.f32 1.0, %v755
        %v757 = vmul.f32 %v754, %v756
        %v758 = vadd.f32 %v754, %v757
        %vm759 = vweird.f32 %v754
        %v760 = vsel %vm759, %v754, %v758
        %v761 = vmul.f32 %v711, %v760
        %v762 = vmul.f32 %v717, %v760
        %v763 = vmul.f32 %v723, %v760
        %v764 = vmul.f32 %v729, %v760
        %v765 = vmul.f32 %v735, %v760
        %v766 = vmul.f32 %v741, %v760
        %v767 = vmul.f32 %v747, %v760
        %v768 = vmul.f32 %v753, %v760
        %v769 = vpack.c.bf16 %v761, %v761
        %v770 = vpack.c.bf16 %v762, %v762
        %v771 = vpack.c.bf16 %v763, %v763
        %v772 = vpack.c.bf16 %v764, %v764
        %v773 = vpack.c.bf16 %v765, %v765
        %v774 = vpack.c.bf16 %v766, %v766
        %v775 = vpack.c.bf16 %v767, %v767
        %v776 = vpack.c.bf16 %v768, %v768
        %v777 = vld [vmem:[#allocation2] sm:$0xf]
        %v778 = vld [vmem:[#allocation2 + $0x4] sm:$0xf]
        %v779 = vld [vmem:[#allocation2 + $0x8] sm:$0xf]
        %v780 = vld [vmem:[#allocation2 + $0xc] sm:$0xf]
        %v781 = vld [vmem:[#allocation2 + $0x10] sm:$0xf]
        %v782 = vld [vmem:[#allocation2 + $0x14] sm:$0xf]
        %v783 = vld [vmem:[#allocation2 + $0x18] sm:$0xf]
        %v784 = vld [vmem:[#allocation2 + $0x1c] sm:$0xf]
        %v785 = vld [vmem:[#allocation2 + $0x20] sm:$0xf]
        %v786 = vld [vmem:[#allocation2 + $0x24] sm:$0xf]
        %v787 = vld [vmem:[#allocation2 + $0x28] sm:$0xf]
        %v788 = vld [vmem:[#allocation2 + $0x2c] sm:$0xf]
        %v789 = vld [vmem:[#allocation2 + $0x30] sm:$0xf]
        %v790 = vld [vmem:[#allocation2 + $0x34] sm:$0xf]
        %v791 = vld [vmem:[#allocation2 + $0x38] sm:$0xf]
        %v792 = vld [vmem:[#allocation2 + $0x3c] sm:$0xf]
        %v793 = vld [vmem:[%s2] sm:$0x1]
        %v795 = vperm.slane %v793, 0
        %v805 = vunpack.c.l.b16 %v769
        %v806 = vunpack.c.l.b16 %v770
        %v807 = vunpack.c.l.b16 %v771
        %v808 = vunpack.c.l.b16 %v772
        %v809 = vunpack.c.l.b16 %v773
        %v810 = vunpack.c.l.b16 %v774
        %v811 = vunpack.c.l.b16 %v775
        %v812 = vunpack.c.l.b16 %v776
        %vm813 = vcmask 1041409
        %v814 = vsel %vm813, %v806, %v805
        %vm815 = vcmask 1042434
        %v816 = vsel %vm815, %v807, %v814
        %vm817 = vcmask 1043459
        %v818 = vsel %vm817, %v808, %v816
        %vm819 = vcmask 1044484
        %v820 = vsel %vm819, %v809, %v818
        %vm821 = vcmask 1045509
        %v822 = vsel %vm821, %v810, %v820
        %vm823 = vcmask 1046534
        %v824 = vsel %vm823, %v811, %v822
        %vm825 = vcmask 1047559
        %v826 = vsel %vm825, %v812, %v824
        %v827 = vpack.c.b16 %v826, %v826
        %v845 = vunpack.c.l.b16 %v777
        %v846 = vunpack.c.l.b16 %v778
        %v847 = vunpack.c.l.b16 %v779
        %v848 = vunpack.c.l.b16 %v780
        %v849 = vunpack.c.l.b16 %v781
        %v850 = vunpack.c.l.b16 %v782
        %v851 = vunpack.c.l.b16 %v783
        %v852 = vunpack.c.l.b16 %v784
        %v853 = vunpack.c.l.b16 %v785
        %v854 = vunpack.c.l.b16 %v786
        %v855 = vunpack.c.l.b16 %v787
        %v856 = vunpack.c.l.b16 %v788
        %v857 = vunpack.c.l.b16 %v789
        %v858 = vunpack.c.l.b16 %v790
        %v859 = vunpack.c.l.b16 %v791
        %v860 = vunpack.c.l.b16 %v792
        %v861 = vpack.c.b16 %v846, %v845
        %v862 = vpack.c.b16 %v848, %v847
        %v863 = vpack.c.b16 %v850, %v849
        %v864 = vpack.c.b16 %v852, %v851
        %v865 = vpack.c.b16 %v854, %v853
        %v866 = vpack.c.b16 %v856, %v855
        %v867 = vpack.c.b16 %v858, %v857
        %v868 = vpack.c.b16 %v860, %v859
        %877 = vmatpush.bf16.msra.mxu0 %v868
        %878 = vmatpush.bf16.msra.mxu0 %v867
        %879 = vmatpush.bf16.msra.mxu0 %v866
        %880 = vmatpush.bf16.msra.mxu0 %v865
        %881 = vmatpush.bf16.msra.mxu0 %v864
        %882 = vmatpush.bf16.msra.mxu0 %v863
        %883 = vmatpush.bf16.msra.mxu0 %v862
        %884 = vmatpush.bf16.msra.mxu0 %v861
        %885 = vmatmul.bf16.gmra.mxu0 %v827
        %v886 = vpop.f32.mrf.mxu0
        %v887 = vadd.f32 %v795, %v886
        %v888 = vpop.f32.mrf.mxu0
        %889 = vdwg.mxu0
        %v890 = vld [vmem:[#allocation5] sm:$0xff]
        %v891 = vld [vmem:[#allocation5 + $0x8] sm:$0xff]
        %v892 = vld [vmem:[#allocation5 + $0x10] sm:$0xff]
        %v893 = vld [vmem:[#allocation5 + $0x18] sm:$0xff]
        %v894 = vld [vmem:[#allocation5 + $0x20] sm:$0xff]
        %v895 = vld [vmem:[#allocation5 + $0x28] sm:$0xff]
        %v896 = vld [vmem:[#allocation5 + $0x30] sm:$0xff]
        %v897 = vld [vmem:[#allocation5 + $0x38] sm:$0xff]
        %v898 = vld [vmem:[#allocation5 + $0x40] sm:$0xff]
        %v899 = vld [vmem:[#allocation5 + $0x48] sm:$0xff]
        %v900 = vld [vmem:[#allocation5 + $0x50] sm:$0xff]
        %v901 = vld [vmem:[#allocation5 + $0x58] sm:$0xff]
        %v902 = vld [vmem:[#allocation5 + $0x60] sm:$0xff]
        %v903 = vld [vmem:[#allocation5 + $0x68] sm:$0xff]
        %v904 = vld [vmem:[#allocation5 + $0x70] sm:$0xff]
        %v905 = vld [vmem:[#allocation5 + $0x78] sm:$0xff]
        %v906 = vld [vmem:[#allocation7] sm:$0x3]
        %v908 = vperm.slane %v906, 0
        %v909 = vperm.slane %v906, 1
        %v920 = vunpack.c.l.b16 %v698
        %v921 = vunpack.c.l.b16 %v699
        %v922 = vunpack.c.l.b16 %v700
        %v923 = vunpack.c.l.b16 %v701
        %v924 = vunpack.c.l.b16 %v702
        %v925 = vunpack.c.l.b16 %v703
        %v926 = vunpack.c.l.b16 %v704
        %v927 = vunpack.c.l.b16 %v705
        %v928 = vpack.c.b16 %v921, %v920
        %v929 = vpack.c.b16 %v923, %v922
        %v930 = vpack.c.b16 %v925, %v924
        %v931 = vpack.c.b16 %v927, %v926
        %v952 = vunpack.c.l.b16 %v890
        %v953 = vunpack.c.h.b16 %v890
        %v954 = vunpack.c.l.b16 %v891
        %v955 = vunpack.c.h.b16 %v891
        %v956 = vunpack.c.l.b16 %v892
        %v957 = vunpack.c.h.b16 %v892
        %v958 = vunpack.c.l.b16 %v893
        %v959 = vunpack.c.h.b16 %v893
        %v960 = vunpack.c.l.b16 %v894
        %v961 = vunpack.c.h.b16 %v894
        %v962 = vunpack.c.l.b16 %v895
        %v963 = vunpack.c.h.b16 %v895
        %v964 = vunpack.c.l.b16 %v896
        %v965 = vunpack.c.h.b16 %v896
        %v966 = vunpack.c.l.b16 %v897
        %v967 = vunpack.c.h.b16 %v897
        %v968 = vunpack.c.l.b16 %v898
        %v969 = vunpack.c.h.b16 %v898
        %v970 = vunpack.c.l.b16 %v899
        %v971 = vunpack.c.h.b16 %v899
        %v972 = vunpack.c.l.b16 %v900
        %v973 = vunpack.c.h.b16 %v900
        %v974 = vunpack.c.l.b16 %v901
        %v975 = vunpack.c.h.b16 %v901
        %v976 = vunpack.c.l.b16 %v902
        %v977 = vunpack.c.h.b16 %v902
        %v978 = vunpack.c.l.b16 %v903
        %v979 = vunpack.c.h.b16 %v903
        %v980 = vunpack.c.l.b16 %v904
        %v981 = vunpack.c.h.b16 %v904
        %v982 = vunpack.c.l.b16 %v905
        %v983 = vunpack.c.h.b16 %v905
        %v984 = vpack.c.b16 %v954, %v952
        %v985 = vpack.c.b16 %v955, %v953
        %v986 = vpack.c.b16 %v958, %v956
        %v987 = vpack.c.b16 %v959, %v957
        %v988 = vpack.c.b16 %v962, %v960
        %v989 = vpack.c.b16 %v963, %v961
        %v990 = vpack.c.b16 %v966, %v964
        %v991 = vpack.c.b16 %v967, %v965
        %v992 = vpack.c.b16 %v970, %v968
        %v993 = vpack.c.b16 %v971, %v969
        %v994 = vpack.c.b16 %v974, %v972
        %v995 = vpack.c.b16 %v975, %v973
        %v996 = vpack.c.b16 %v978, %v976
        %v997 = vpack.c.b16 %v979, %v977
        %v998 = vpack.c.b16 %v982, %v980
        %v999 = vpack.c.b16 %v983, %v981
        %1016 = vmatpush.bf16.msra.mxu0 %v998
        %1017 = vmatpush.bf16.msra.mxu0 %v996
        %1018 = vmatpush.bf16.msra.mxu0 %v994
        %1019 = vmatpush.bf16.msra.mxu0 %v992
        %1020 = vmatpush.bf16.msra.mxu0 %v990
        %1021 = vmatpush.bf16.msra.mxu0 %v988
        %1022 = vmatpush.bf16.msra.mxu0 %v986
        %1023 = vmatpush.bf16.msra.mxu0 %v984
        %1024 = vmatmul.bf16.gmra.mxu0 %v928
        %v1025 = vpop.f32.mrf.mxu0
        %v1026 = vadd.f32 %v908, %v1025
        %v1027 = vpop.f32.mrf.mxu0
        %v1028 = vadd.f32 %v908, %v1027
        %1029 = vmatmul.bf16.gmra.mxu0 %v929
        %v1030 = vpop.f32.mrf.mxu0
        %v1031 = vadd.f32 %v908, %v1030
        %v1032 = vpop.f32.mrf.mxu0
        %v1033 = vadd.f32 %v908, %v1032
        %1034 = vmatmul.bf16.gmra.mxu0 %v930
        %v1035 = vpop.f32.mrf.mxu0
        %v1036 = vadd.f32 %v908, %v1035
        %v1037 = vpop.f32.mrf.mxu0
        %v1038 = vadd.f32 %v908, %v1037
        %1039 = vmatmul.bf16.gmra.mxu0 %v931
        %v1040 = vpop.f32.mrf.mxu0
        %v1041 = vadd.f32 %v908, %v1040
        %v1042 = vpop.f32.mrf.mxu0
        %v1043 = vadd.f32 %v908, %v1042
        %1044 = vdwg.mxu0
        %1045 = vmatpush.bf16.msra.mxu0 %v999
        %1046 = vmatpush.bf16.msra.mxu0 %v997
        %1047 = vmatpush.bf16.msra.mxu0 %v995
        %1048 = vmatpush.bf16.msra.mxu0 %v993
        %1049 = vmatpush.bf16.msra.mxu0 %v991
        %1050 = vmatpush.bf16.msra.mxu0 %v989
        %1051 = vmatpush.bf16.msra.mxu0 %v987
        %1052 = vmatpush.bf16.msra.mxu0 %v985
        %1053 = vmatmul.bf16.gmra.mxu0 %v928
        %v1054 = vpop.f32.mrf.mxu0
        %v1055 = vadd.f32 %v909, %v1054
        %v1056 = vpop.f32.mrf.mxu0
        %v1057 = vadd.f32 %v909, %v1056
        %1058 = vmatmul.bf16.gmra.mxu0 %v929
        %v1059 = vpop.f32.mrf.mxu0
        %v1060 = vadd.f32 %v909, %v1059
        %v1061 = vpop.f32.mrf.mxu0
        %v1062 = vadd.f32 %v909, %v1061
        %1063 = vmatmul.bf16.gmra.mxu0 %v930
        %v1064 = vpop.f32.mrf.mxu0
        %v1065 = vadd.f32 %v909, %v1064
        %v1066 = vpop.f32.mrf.mxu0
        %v1067 = vadd.f32 %v909, %v1066
        %1068 = vmatmul.bf16.gmra.mxu0 %v931
        %v1069 = vpop.f32.mrf.mxu0
        %v1070 = vadd.f32 %v909, %v1069
        %v1071 = vpop.f32.mrf.mxu0
        %v1072 = vadd.f32 %v909, %v1071
        %1073 = vdwg.mxu0
        %v1075 = vrot.slane %v887, 1
        %v1076 = vrot.slane %v887, 2
        %v1077 = vrot.slane %v887, 3
        %v1078 = vrot.slane %v887, 4
        %v1079 = vrot.slane %v887, 5
        %v1080 = vrot.slane %v887, 6
        %v1081 = vrot.slane %v887, 7
        %v1082 = vperm.slane %v887, 0
        %v1083 = vperm.slane %v1075, 0
        %v1084 = vperm.slane %v1076, 0
        %v1085 = vperm.slane %v1077, 0
        %v1086 = vperm.slane %v1078, 0
        %v1087 = vperm.slane %v1079, 0
        %v1088 = vperm.slane %v1080, 0
        %v1089 = vperm.slane %v1081, 0
        %v1098 = vmul.f32 %v1082, %v1026
        %v1099 = vmul.f32 %v1083, %v1028
        %v1100 = vmul.f32 %v1084, %v1031
        %v1101 = vmul.f32 %v1085, %v1033
        %v1102 = vmul.f32 %v1086, %v1036
        %v1103 = vmul.f32 %v1087, %v1038
        %v1104 = vmul.f32 %v1088, %v1041
        %v1105 = vmul.f32 %v1089, %v1043
        %v1106 = vld [vmem:[%s15] sm:$0xff]
        %v1107 = vld [vmem:[%s15 + $0x8] sm:$0xff]
        %v1108 = vld [vmem:[%s15 + $0x10] sm:$0xff]
        %v1109 = vld [vmem:[%s15 + $0x18] sm:$0xff]
        %v1110 = vld [vmem:[%s15 + $0x20] sm:$0xff]
        %v1111 = vld [vmem:[%s15 + $0x28] sm:$0xff]
        %v1112 = vld [vmem:[%s15 + $0x30] sm:$0xff]
        %v1113 = vld [vmem:[%s15 + $0x38] sm:$0xff]
        %v1114 = vld [vmem:[%s15 + $0x40] sm:$0xff]
        %v1115 = vld [vmem:[%s15 + $0x48] sm:$0xff]
        %v1116 = vld [vmem:[%s15 + $0x50] sm:$0xff]
        %v1117 = vld [vmem:[%s15 + $0x58] sm:$0xff]
        %v1118 = vld [vmem:[%s15 + $0x60] sm:$0xff]
        %v1119 = vld [vmem:[%s15 + $0x68] sm:$0xff]
        %v1120 = vld [vmem:[%s15 + $0x70] sm:$0xff]
        %v1121 = vld [vmem:[%s15 + $0x78] sm:$0xff]
        %1122 = vmatpush.msra.mxu0 %v1121
        %1123 = vmatpush.msra.mxu0 %v1120
        %1124 = vmatpush.msra.mxu0 %v1119
        %1125 = vmatpush.msra.mxu0 %v1118
        %1126 = vmatpush.msra.mxu0 %v1117
        %1127 = vmatpush.msra.mxu0 %v1116
        %1128 = vmatpush.msra.mxu0 %v1115
        %1129 = vmatpush.msra.mxu0 %v1114
        %1130 = vmatpush.msra.mxu0 %v1113
        %1131 = vmatpush.msra.mxu0 %v1112
        %1132 = vmatpush.msra.mxu0 %v1111
        %1133 = vmatpush.msra.mxu0 %v1110
        %1134 = vmatpush.msra.mxu0 %v1109
        %1135 = vmatpush.msra.mxu0 %v1108
        %1136 = vmatpush.msra.mxu0 %v1107
        %1137 = vmatpush.msra.mxu0 %v1106
        %1138 = vmatmul.f32.gmra.mxu0 %v1098
        %v1139 = vpop.f32.mrf.mxu0
        %v1140 = vadd.f32 0.0, %v1139
        %1141 = vmatmul.f32.gmra.mxu0 %v1099
        %v1142 = vpop.f32.mrf.mxu0
        %v1143 = vadd.f32 0.0, %v1142
        %1144 = vmatmul.f32.gmra.mxu0 %v1100
        %v1145 = vpop.f32.mrf.mxu0
        %v1146 = vadd.f32 0.0, %v1145
        %1147 = vmatmul.f32.gmra.mxu0 %v1101
        %v1148 = vpop.f32.mrf.mxu0
        %v1149 = vadd.f32 0.0, %v1148
        %1150 = vmatmul.f32.gmra.mxu0 %v1102
        %v1151 = vpop.f32.mrf.mxu0
        %v1152 = vadd.f32 0.0, %v1151
        %1153 = vmatmul.f32.gmra.mxu0 %v1103
        %v1154 = vpop.f32.mrf.mxu0
        %v1155 = vadd.f32 0.0, %v1154
        %1156 = vmatmul.f32.gmra.mxu0 %v1104
        %v1157 = vpop.f32.mrf.mxu0
        %v1158 = vadd.f32 0.0, %v1157
        %1159 = vmatmul.f32.gmra.mxu0 %v1105
        %v1160 = vpop.f32.mrf.mxu0
        %v1161 = vadd.f32 0.0, %v1160
        %1162 = vdwg.mxu0
        %vm1163 = vcmask 31744
        %v1164 = vsel %vm1163, %v1140, -inf
        %v1165 = vrot.slane %v1164, 4
        %v1166 = vmax.f32 %v1164, %v1165
        %v1167 = vrot.slane %v1166, 2
        %v1168 = vmax.f32 %v1166, %v1167
        %v1169 = vrot.slane %v1168, 1
        %v1170 = vmax.f32 %v1168, %v1169
        %v1171 = vsel %vm1163, %v1143, -inf
        %v1172 = vrot.slane %v1171, 4
        %v1173 = vmax.f32 %v1171, %v1172
        %v1174 = vrot.slane %v1173, 2
        %v1175 = vmax.f32 %v1173, %v1174
        %v1176 = vrot.slane %v1175, 1
        %v1177 = vmax.f32 %v1175, %v1176
        %v1178 = vsel %vm1163, %v1146, -inf
        %v1179 = vrot.slane %v1178, 4
        %v1180 = vmax.f32 %v1178, %v1179
        %v1181 = vrot.slane %v1180, 2
        %v1182 = vmax.f32 %v1180, %v1181
        %v1183 = vrot.slane %v1182, 1
        %v1184 = vmax.f32 %v1182, %v1183
        %v1185 = vsel %vm1163, %v1149, -inf
        %v1186 = vrot.slane %v1185, 4
        %v1187 = vmax.f32 %v1185, %v1186
        %v1188 = vrot.slane %v1187, 2
        %v1189 = vmax.f32 %v1187, %v1188
        %v1190 = vrot.slane %v1189, 1
        %v1191 = vmax.f32 %v1189, %v1190
        %v1192 = vsel %vm1163, %v1152, -inf
        %v1193 = vrot.slane %v1192, 4
        %v1194 = vmax.f32 %v1192, %v1193
        %v1195 = vrot.slane %v1194, 2
        %v1196 = vmax.f32 %v1194, %v1195
        %v1197 = vrot.slane %v1196, 1
        %v1198 = vmax.f32 %v1196, %v1197
        %v1199 = vsel %vm1163, %v1155, -inf
        %v1200 = vrot.slane %v1199, 4
        %v1201 = vmax.f32 %v1199, %v1200
        %v1202 = vrot.slane %v1201, 2
        %v1203 = vmax.f32 %v1201, %v1202
        %v1204 = vrot.slane %v1203, 1
        %v1205 = vmax.f32 %v1203, %v1204
        %v1206 = vsel %vm1163, %v1158, -inf
        %v1207 = vrot.slane %v1206, 4
        %v1208 = vmax.f32 %v1206, %v1207
        %v1209 = vrot.slane %v1208, 2
        %v1210 = vmax.f32 %v1208, %v1209
        %v1211 = vrot.slane %v1210, 1
        %v1212 = vmax.f32 %v1210, %v1211
        %v1213 = vsel %vm1163, %v1161, -inf
        %v1214 = vrot.slane %v1213, 4
        %v1215 = vmax.f32 %v1213, %v1214
        %v1216 = vrot.slane %v1215, 2
        %v1217 = vmax.f32 %v1215, %v1216
        %v1218 = vrot.slane %v1217, 1
        %v1219 = vmax.f32 %v1217, %v1218
        %v1220 = vsub.f32 %v1140, %v1170
        %v1221 = vsub.f32 %v1143, %v1177
        %v1222 = vsub.f32 %v1146, %v1184
        %v1223 = vsub.f32 %v1149, %v1191
        %v1224 = vsub.f32 %v1152, %v1198
        %v1225 = vsub.f32 %v1155, %v1205
        %v1226 = vsub.f32 %v1158, %v1212
        %v1227 = vsub.f32 %v1161, %v1219
        %v1228 = vmul.f32 %v1220, 1.442695
        %v1229 = vpow.pop %v1228
        %v1230 = vmul.f32 %v1221, 1.442695
        %v1231 = vpow.pop %v1230
        %v1232 = vmul.f32 %v1222, 1.442695
        %v1233 = vpow.pop %v1232
        %v1234 = vmul.f32 %v1223, 1.442695
        %v1235 = vpow.pop %v1234
        %v1236 = vmul.f32 %v1224, 1.442695
        %v1237 = vpow.pop %v1236
        %v1238 = vmul.f32 %v1225, 1.442695
        %v1239 = vpow.pop %v1238
        %v1240 = vmul.f32 %v1226, 1.442695
        %v1241 = vpow.pop %v1240
        %v1242 = vmul.f32 %v1227, 1.442695
        %v1243 = vpow.pop %v1242
        %v1244 = vsel %vm1163, %v1229, 0.0
        %v1245 = vrot.slane %v1244, 4
        %v1246 = vadd.f32 %v1244, %v1245
        %v1247 = vrot.slane %v1246, 2
        %v1248 = vadd.f32 %v1246, %v1247
        %v1249 = vrot.slane %v1248, 1
        %v1250 = vadd.f32 %v1248, %v1249
        %v1251 = vsel %vm1163, %v1231, 0.0
        %v1252 = vrot.slane %v1251, 4
        %v1253 = vadd.f32 %v1251, %v1252
        %v1254 = vrot.slane %v1253, 2
        %v1255 = vadd.f32 %v1253, %v1254
        %v1256 = vrot.slane %v1255, 1
        %v1257 = vadd.f32 %v1255, %v1256
        %v1258 = vsel %vm1163, %v1233, 0.0
        %v1259 = vrot.slane %v1258, 4
        %v1260 = vadd.f32 %v1258, %v1259
        %v1261 = vrot.slane %v1260, 2
        %v1262 = vadd.f32 %v1260, %v1261
        %v1263 = vrot.slane %v1262, 1
        %v1264 = vadd.f32 %v1262, %v1263
        %v1265 = vsel %vm1163, %v1235, 0.0
        %v1266 = vrot.slane %v1265, 4
        %v1267 = vadd.f32 %v1265, %v1266
        %v1268 = vrot.slane %v1267, 2
        %v1269 = vadd.f32 %v1267, %v1268
        %v1270 = vrot.slane %v1269, 1
        %v1271 = vadd.f32 %v1269, %v1270
        %v1272 = vsel %vm1163, %v1237, 0.0
        %v1273 = vrot.slane %v1272, 4
        %v1274 = vadd.f32 %v1272, %v1273
        %v1275 = vrot.slane %v1274, 2
        %v1276 = vadd.f32 %v1274, %v1275
        %v1277 = vrot.slane %v1276, 1
        %v1278 = vadd.f32 %v1276, %v1277
        %v1279 = vsel %vm1163, %v1239, 0.0
        %v1280 = vrot.slane %v1279, 4
        %v1281 = vadd.f32 %v1279, %v1280
        %v1282 = vrot.slane %v1281, 2
        %v1283 = vadd.f32 %v1281, %v1282
        %v1284 = vrot.slane %v1283, 1
        %v1285 = vadd.f32 %v1283, %v1284
        %v1286 = vsel %vm1163, %v1241, 0.0
        %v1287 = vrot.slane %v1286, 4
        %v1288 = vadd.f32 %v1286, %v1287
        %v1289 = vrot.slane %v1288, 2
        %v1290 = vadd.f32 %v1288, %v1289
        %v1291 = vrot.slane %v1290, 1
        %v1292 = vadd.f32 %v1290, %v1291
        %v1293 = vsel %vm1163, %v1243, 0.0
        %v1294 = vrot.slane %v1293, 4
        %v1295 = vadd.f32 %v1293, %v1294
        %v1296 = vrot.slane %v1295, 2
        %v1297 = vadd.f32 %v1295, %v1296
        %v1298 = vrot.slane %v1297, 1
        %v1299 = vadd.f32 %v1297, %v1298
        %v1300 = vrcp.pop %v1250
        %v1301 = vrcp.pop %v1257
        %v1302 = vrcp.pop %v1264
        %v1303 = vrcp.pop %v1271
        %v1304 = vrcp.pop %v1278
        %v1305 = vrcp.pop %v1285
        %v1306 = vrcp.pop %v1292
        %v1307 = vrcp.pop %v1299
        %v1308 = vmul.f32 %v1229, %v1300
        %v1309 = vmul.f32 %v1231, %v1301
        %v1310 = vmul.f32 %v1233, %v1302
        %v1311 = vmul.f32 %v1235, %v1303
        %v1312 = vmul.f32 %v1237, %v1304
        %v1313 = vmul.f32 %v1239, %v1305
        %v1314 = vmul.f32 %v1241, %v1306
        %v1315 = vmul.f32 %v1243, %v1307
        %v1316 = vld [vmem:[%s16] sm:$0xf]
        %v1318 = vsel %vm1163, %v1308, 0
        %v1321 = vsel %vm1163, %v1309, 0
        %v1324 = vsel %vm1163, %v1310, 0
        %v1327 = vsel %vm1163, %v1311, 0
        %v1330 = vsel %vm1163, %v1312, 0
        %v1333 = vsel %vm1163, %v1313, 0
        %v1336 = vsel %vm1163, %v1314, 0
        %v1339 = vsel %vm1163, %v1315, 0
        %vm1341 = vcmask 1043456
        %v1343 = vsel %vm1341, %v1316, 0
        %1345 = vmatpush.msra.mxu0 0.0
        %1346 = vmatpush.msra.mxu0 0.0
        %1347 = vmatpush.msra.mxu0 0.0
        %1348 = vmatpush.msra.mxu0 0.0
        %1349 = vmatpush.msra.mxu0 0.0
        %1350 = vmatpush.msra.mxu0 0.0
        %1351 = vmatpush.msra.mxu0 0.0
        %1352 = vmatpush.msra.mxu0 0.0
        %1353 = vmatpush.msra.mxu0 0.0
        %1354 = vmatpush.msra.mxu0 0.0
        %1355 = vmatpush.msra.mxu0 0.0
        %1356 = vmatpush.msra.mxu0 0.0
        %1357 = vmatpush.msra.mxu0 0.0
        %1358 = vmatpush.msra.mxu0 0.0
        %1359 = vmatpush.msra.mxu0 0.0
        %1360 = vmatpush.msra.mxu0 %v1343
        %1361 = vmatmul.f32.gmra.mxu0 %v1318
        %v1362 = vpop.f32.mrf.mxu0
        %v1363 = vadd.f32 0.0, %v1362
        %1364 = vmatmul.f32.gmra.mxu0 %v1321
        %v1365 = vpop.f32.mrf.mxu0
        %v1366 = vadd.f32 0.0, %v1365
        %1367 = vmatmul.f32.gmra.mxu0 %v1324
        %v1368 = vpop.f32.mrf.mxu0
        %v1369 = vadd.f32 0.0, %v1368
        %1370 = vmatmul.f32.gmra.mxu0 %v1327
        %v1371 = vpop.f32.mrf.mxu0
        %v1372 = vadd.f32 0.0, %v1371
        %1373 = vmatmul.f32.gmra.mxu0 %v1330
        %v1374 = vpop.f32.mrf.mxu0
        %v1375 = vadd.f32 0.0, %v1374
        %1376 = vmatmul.f32.gmra.mxu0 %v1333
        %v1377 = vpop.f32.mrf.mxu0
        %v1378 = vadd.f32 0.0, %v1377
        %1379 = vmatmul.f32.gmra.mxu0 %v1336
        %v1380 = vpop.f32.mrf.mxu0
        %v1381 = vadd.f32 0.0, %v1380
        %1382 = vmatmul.f32.gmra.mxu0 %v1339
        %v1383 = vpop.f32.mrf.mxu0
        %v1384 = vadd.f32 0.0, %v1383
        %1385 = vdwg.mxu0
        %v1386 = vmul.f32 %v1363, %v1055
        %v1387 = vmul.f32 %v1366, %v1057
        %v1388 = vmul.f32 %v1369, %v1060
        %v1389 = vmul.f32 %v1372, %v1062
        %v1390 = vmul.f32 %v1375, %v1065
        %v1391 = vmul.f32 %v1378, %v1067
        %v1392 = vmul.f32 %v1381, %v1070
        %v1393 = vmul.f32 %v1384, %v1072
        %v1394 = vrot.slane %v1386, 4
        %v1395 = vadd.f32 %v1386, %v1394
        %v1396 = vrot.slane %v1395, 2
        %v1397 = vadd.f32 %v1395, %v1396
        %v1398 = vrot.slane %v1397, 1
        %v1399 = vadd.f32 %v1397, %v1398
        %v1400 = vrot.slane %v1387, 4
        %v1401 = vadd.f32 %v1387, %v1400
        %v1402 = vrot.slane %v1401, 2
        %v1403 = vadd.f32 %v1401, %v1402
        %v1404 = vrot.slane %v1403, 1
        %v1405 = vadd.f32 %v1403, %v1404
        %v1406 = vrot.slane %v1388, 4
        %v1407 = vadd.f32 %v1388, %v1406
        %v1408 = vrot.slane %v1407, 2
        %v1409 = vadd.f32 %v1407, %v1408
        %v1410 = vrot.slane %v1409, 1
        %v1411 = vadd.f32 %v1409, %v1410
        %v1412 = vrot.slane %v1389, 4
        %v1413 = vadd.f32 %v1389, %v1412
        %v1414 = vrot.slane %v1413, 2
        %v1415 = vadd.f32 %v1413, %v1414
        %v1416 = vrot.slane %v1415, 1
        %v1417 = vadd.f32 %v1415, %v1416
        %v1418 = vrot.slane %v1390, 4
        %v1419 = vadd.f32 %v1390, %v1418
        %v1420 = vrot.slane %v1419, 2
        %v1421 = vadd.f32 %v1419, %v1420
        %v1422 = vrot.slane %v1421, 1
        %v1423 = vadd.f32 %v1421, %v1422
        %v1424 = vrot.slane %v1391, 4
        %v1425 = vadd.f32 %v1391, %v1424
        %v1426 = vrot.slane %v1425, 2
        %v1427 = vadd.f32 %v1425, %v1426
        %v1428 = vrot.slane %v1427, 1
        %v1429 = vadd.f32 %v1427, %v1428
        %v1430 = vrot.slane %v1392, 4
        %v1431 = vadd.f32 %v1392, %v1430
        %v1432 = vrot.slane %v1431, 2
        %v1433 = vadd.f32 %v1431, %v1432
        %v1434 = vrot.slane %v1433, 1
        %v1435 = vadd.f32 %v1433, %v1434
        %v1436 = vrot.slane %v1393, 4
        %v1437 = vadd.f32 %v1393, %v1436
        %v1438 = vrot.slane %v1437, 2
        %v1439 = vadd.f32 %v1437, %v1438
        %v1440 = vrot.slane %v1439, 1
        %v1441 = vadd.f32 %v1439, %v1440
        %v1442 = vpack.c.bf16 %v1399, %v1399
        %v1443 = vpack.c.bf16 %v1405, %v1405
        %v1444 = vpack.c.bf16 %v1411, %v1411
        %v1445 = vpack.c.bf16 %v1417, %v1417
        %v1446 = vpack.c.bf16 %v1423, %v1423
        %v1447 = vpack.c.bf16 %v1429, %v1429
        %v1448 = vpack.c.bf16 %v1435, %v1435
        %v1449 = vpack.c.bf16 %v1441, %v1441
        %v1450 = vld [vmem:[#allocation8] sm:$0xf]
        %v1451 = vld [vmem:[#allocation8 + $0x4] sm:$0xf]
        %v1452 = vld [vmem:[#allocation8 + $0x8] sm:$0xf]
        %v1453 = vld [vmem:[#allocation8 + $0xc] sm:$0xf]
        %v1454 = vld [vmem:[#allocation8 + $0x10] sm:$0xf]
        %v1455 = vld [vmem:[#allocation8 + $0x14] sm:$0xf]
        %v1456 = vld [vmem:[#allocation8 + $0x18] sm:$0xf]
        %v1457 = vld [vmem:[#allocation8 + $0x1c] sm:$0xf]
        %v1458 = vld [vmem:[#allocation8 + $0x20] sm:$0xf]
        %v1459 = vld [vmem:[#allocation8 + $0x24] sm:$0xf]
        %v1460 = vld [vmem:[#allocation8 + $0x28] sm:$0xf]
        %v1461 = vld [vmem:[#allocation8 + $0x2c] sm:$0xf]
        %v1462 = vld [vmem:[#allocation8 + $0x30] sm:$0xf]
        %v1463 = vld [vmem:[#allocation8 + $0x34] sm:$0xf]
        %v1464 = vld [vmem:[#allocation8 + $0x38] sm:$0xf]
        %v1465 = vld [vmem:[#allocation8 + $0x3c] sm:$0xf]
        %v1466 = vld [vmem:[#allocation10] sm:$0x1]
        %v1468 = vperm.slane %v1466, 0
        %v1478 = vunpack.c.l.b16 %v1442
        %v1479 = vunpack.c.l.b16 %v1443
        %v1480 = vunpack.c.l.b16 %v1444
        %v1481 = vunpack.c.l.b16 %v1445
        %v1482 = vunpack.c.l.b16 %v1446
        %v1483 = vunpack.c.l.b16 %v1447
        %v1484 = vunpack.c.l.b16 %v1448
        %v1485 = vunpack.c.l.b16 %v1449
        %v1486 = vsel %vm813, %v1479, %v1478
        %v1487 = vsel %vm815, %v1480, %v1486
        %v1488 = vsel %vm817, %v1481, %v1487
        %v1489 = vsel %vm819, %v1482, %v1488
        %v1490 = vsel %vm821, %v1483, %v1489
        %v1491 = vsel %vm823, %v1484, %v1490
        %v1492 = vsel %vm825, %v1485, %v1491
        %v1493 = vpack.c.b16 %v1492, %v1492
        %v1511 = vunpack.c.l.b16 %v1450
        %v1512 = vunpack.c.l.b16 %v1451
        %v1513 = vunpack.c.l.b16 %v1452
        %v1514 = vunpack.c.l.b16 %v1453
        %v1515 = vunpack.c.l.b16 %v1454
        %v1516 = vunpack.c.l.b16 %v1455
        %v1517 = vunpack.c.l.b16 %v1456
        %v1518 = vunpack.c.l.b16 %v1457
        %v1519 = vunpack.c.l.b16 %v1458
        %v1520 = vunpack.c.l.b16 %v1459
        %v1521 = vunpack.c.l.b16 %v1460
        %v1522 = vunpack.c.l.b16 %v1461
        %v1523 = vunpack.c.l.b16 %v1462
        %v1524 = vunpack.c.l.b16 %v1463
        %v1525 = vunpack.c.l.b16 %v1464
        %v1526 = vunpack.c.l.b16 %v1465
        %v1527 = vpack.c.b16 %v1512, %v1511
        %v1528 = vpack.c.b16 %v1514, %v1513
        %v1529 = vpack.c.b16 %v1516, %v1515
        %v1530 = vpack.c.b16 %v1518, %v1517
        %v1531 = vpack.c.b16 %v1520, %v1519
        %v1532 = vpack.c.b16 %v1522, %v1521
        %v1533 = vpack.c.b16 %v1524, %v1523
        %v1534 = vpack.c.b16 %v1526, %v1525
        %1543 = vmatpush.bf16.msra.mxu0 %v1534
        %1544 = vmatpush.bf16.msra.mxu0 %v1533
        %1545 = vmatpush.bf16.msra.mxu0 %v1532
        %1546 = vmatpush.bf16.msra.mxu0 %v1531
        %1547 = vmatpush.bf16.msra.mxu0 %v1530
        %1548 = vmatpush.bf16.msra.mxu0 %v1529
        %1549 = vmatpush.bf16.msra.mxu0 %v1528
        %1550 = vmatpush.bf16.msra.mxu0 %v1527
        %1551 = vmatmul.bf16.gmra.mxu0 %v1493
        %v1552 = vpop.f32.mrf.mxu0
        %v1553 = vadd.f32 %v1468, %v1552
        %v1554 = vpop.f32.mrf.mxu0
        %1555 = vdwg.mxu0
        %v1557 = vrot.slane %v1553, 1
        %v1558 = vrot.slane %v1553, 2
        %v1559 = vrot.slane %v1553, 3
        %v1560 = vrot.slane %v1553, 4
        %v1561 = vrot.slane %v1553, 5
        %v1562 = vrot.slane %v1553, 6
        %v1563 = vrot.slane %v1553, 7
        %v1572 = vadd.f32 %v761, %v1553
        %v1573 = vadd.f32 %v762, %v1557
        %v1574 = vadd.f32 %v763, %v1558
        %v1575 = vadd.f32 %v764, %v1559
        %v1576 = vadd.f32 %v765, %v1560
        %v1577 = vadd.f32 %v766, %v1561
        %v1578 = vadd.f32 %v767, %v1562
        %v1579 = vadd.f32 %v768, %v1563
        %v1588 = vrot.slane %v1573, 7
        %v1589 = vsel %vm813, %v1588, %v1572
        %v1590 = vrot.slane %v1574, 6
        %v1591 = vsel %vm815, %v1590, %v1589
        %v1592 = vrot.slane %v1575, 5
        %v1593 = vsel %vm817, %v1592, %v1591
        %v1594 = vrot.slane %v1576, 4
        %v1595 = vsel %vm819, %v1594, %v1593
        %v1596 = vrot.slane %v1577, 3
        %v1597 = vsel %vm821, %v1596, %v1595
        %v1598 = vrot.slane %v1578, 2
        %v1599 = vsel %vm823, %v1598, %v1597
        %v1600 = vrot.slane %v1579, 1
        %v1601 = vsel %vm825, %v1600, %v1599
        %1603 = vadd.xlane.f32.xlu0 %v1601
        %v1604 = vpop.xlane.xlu0 %1603
        %v1605 = vrcp.pop 128.0
        %v1606 = vmul.f32 128.0, %v1605
        %v1607 = vsub.f32 1.0, %v1606
        %v1608 = vmul.f32 %v1605, %v1607
        %v1609 = vadd.f32 %v1605, %v1608
        %vm1610 = vweird.f32 %v1605
        %v1611 = vsel %vm1610, %v1605, %v1609
        %v1612 = vmul.f32 %v1604, %v1611
        %v1614 = vrot.slane %v1612, 1
        %v1615 = vrot.slane %v1612, 2
        %v1616 = vrot.slane %v1612, 3
        %v1617 = vrot.slane %v1612, 4
        %v1618 = vrot.slane %v1612, 5
        %v1619 = vrot.slane %v1612, 6
        %v1620 = vrot.slane %v1612, 7
        %v1629 = vsub.f32 %v1572, %v1612
        %v1630 = vsub.f32 %v1573, %v1614
        %v1631 = vsub.f32 %v1574, %v1615
        %v1632 = vsub.f32 %v1575, %v1616
        %v1633 = vsub.f32 %v1576, %v1617
        %v1634 = vsub.f32 %v1577, %v1618
        %v1635 = vsub.f32 %v1578, %v1619
        %v1636 = vsub.f32 %v1579, %v1620
        %v1637 = vmul.f32 %v1629, %v1629
        %v1638 = vmul.f32 %v1630, %v1630
        %v1639 = vmul.f32 %v1631, %v1631
        %v1640 = vmul.f32 %v1632, %v1632
        %v1641 = vmul.f32 %v1633, %v1633
        %v1642 = vmul.f32 %v1634, %v1634
        %v1643 = vmul.f32 %v1635, %v1635
        %v1644 = vmul.f32 %v1636, %v1636
        %v1653 = vrot.slane %v1638, 7
        %v1654 = vsel %vm813, %v1653, %v1637
        %v1655 = vrot.slane %v1639, 6
        %v1656 = vsel %vm815, %v1655, %v1654
        %v1657 = vrot.slane %v1640, 5
        %v1658 = vsel %vm817, %v1657, %v1656
        %v1659 = vrot.slane %v1641, 4
        %v1660 = vsel %vm819, %v1659, %v1658
        %v1661 = vrot.slane %v1642, 3
        %v1662 = vsel %vm821, %v1661, %v1660
        %v1663 = vrot.slane %v1643, 2
        %v1664 = vsel %vm823, %v1663, %v1662
        %v1665 = vrot.slane %v1644, 1
        %v1666 = vsel %vm825, %v1665, %v1664
        %1668 = vadd.xlane.f32.xlu0 %v1666
        %v1669 = vpop.xlane.xlu0 %1668
        %v1670 = vmul.f32 %v1669, %v1611
        %v1671 = vadd.f32 %v1670, 1e-05
        %v1672 = vrsqrt.pop %v1671
        %v1673 = vmul.f32 %v1672, %v1671
        %v1674 = vmul.f32 %v1673, %v1672
        %v1675 = vmul.f32 0.5, %v1674
        %v1676 = vsub.f32 1.5, %v1675
        %v1677 = vmul.f32 %v1672, %v1676
        %vm1678 = vweird.f32 %v1671
        %vm1679 = vweird.f32 %v1672
        %vm1680 = vmor %vm1678, %vm1679
        %v1681 = vsel %vm1680, %v1672, %v1677
        %v1683 = vrot.slane %v1681, 1
        %v1684 = vrot.slane %v1681, 2
        %v1685 = vrot.slane %v1681, 3
        %v1686 = vrot.slane %v1681, 4
        %v1687 = vrot.slane %v1681, 5
        %v1688 = vrot.slane %v1681, 6
        %v1689 = vrot.slane %v1681, 7
        %v1698 = vmul.f32 %v1629, %v1681
        %v1699 = vmul.f32 %v1630, %v1683
        %v1700 = vmul.f32 %v1631, %v1684
        %v1701 = vmul.f32 %v1632, %v1685
        %v1702 = vmul.f32 %v1633, %v1686
        %v1703 = vmul.f32 %v1634, %v1687
        %v1704 = vmul.f32 %v1635, %v1688
        %v1705 = vmul.f32 %v1636, %v1689
        %v1706 = vld [vmem:[#allocation11] sm:$0x1]
        %v1708 = vperm.slane %v1706, 0
        %v1710 = vmul.f32 %v1698, %v1708
        %v1711 = vmul.f32 %v1699, %v1708
        %v1712 = vmul.f32 %v1700, %v1708
        %v1713 = vmul.f32 %v1701, %v1708
        %v1714 = vmul.f32 %v1702, %v1708
        %v1715 = vmul.f32 %v1703, %v1708
        %v1716 = vmul.f32 %v1704, %v1708
        %v1717 = vmul.f32 %v1705, %v1708
        %v1718 = vld [vmem:[#allocation13] sm:$0x1]
        %v1720 = vperm.slane %v1718, 0
        %v1722 = vadd.f32 %v1710, %v1720
        %v1723 = vadd.f32 %v1711, %v1720
        %v1724 = vadd.f32 %v1712, %v1720
        %v1725 = vadd.f32 %v1713, %v1720
        %v1726 = vadd.f32 %v1714, %v1720
        %v1727 = vadd.f32 %v1715, %v1720
        %v1728 = vadd.f32 %v1716, %v1720
        %v1729 = vadd.f32 %v1717, %v1720
        %v1730 = vpack.c.bf16 %v1722, %v1722
        %v1731 = vpack.c.bf16 %v1723, %v1723
        %v1732 = vpack.c.bf16 %v1724, %v1724
        %v1733 = vpack.c.bf16 %v1725, %v1725
        %v1734 = vpack.c.bf16 %v1726, %v1726
        %v1735 = vpack.c.bf16 %v1727, %v1727
        %v1736 = vpack.c.bf16 %v1728, %v1728
        %v1737 = vpack.c.bf16 %v1729, %v1729
        %v1738 = vld [vmem:[#allocation14] sm:$0xff]
        %v1739 = vld [vmem:[#allocation14 + $0x8] sm:$0xff]
        %v1740 = vld [vmem:[#allocation14 + $0x10] sm:$0xff]
        %v1741 = vld [vmem:[#allocation14 + $0x18] sm:$0xff]
        %v1742 = vld [vmem:[#allocation14 + $0x20] sm:$0xff]
        %v1743 = vld [vmem:[#allocation14 + $0x28] sm:$0xff]
        %v1744 = vld [vmem:[#allocation14 + $0x30] sm:$0xff]
        %v1745 = vld [vmem:[#allocation14 + $0x38] sm:$0xff]
        %v1746 = vld [vmem:[#allocation14 + $0x40] sm:$0xff]
        %v1747 = vld [vmem:[#allocation14 + $0x48] sm:$0xff]
        %v1748 = vld [vmem:[#allocation14 + $0x50] sm:$0xff]
        %v1749 = vld [vmem:[#allocation14 + $0x58] sm:$0xff]
        %v1750 = vld [vmem:[#allocation14 + $0x60] sm:$0xff]
        %v1751 = vld [vmem:[#allocation14 + $0x68] sm:$0xff]
        %v1752 = vld [vmem:[#allocation14 + $0x70] sm:$0xff]
        %v1753 = vld [vmem:[#allocation14 + $0x78] sm:$0xff]
        %v1754 = vld [vmem:[#allocation14 + $0x80] sm:$0xff]
        %v1755 = vld [vmem:[#allocation14 + $0x88] sm:$0xff]
        %v1756 = vld [vmem:[#allocation14 + $0x90] sm:$0xff]
        %v1757 = vld [vmem:[#allocation14 + $0x98] sm:$0xff]
        %v1758 = vld [vmem:[#allocation14 + $0xa0] sm:$0xff]
        %v1759 = vld [vmem:[#allocation14 + $0xa8] sm:$0xff]
        %v1760 = vld [vmem:[#allocation14 + $0xb0] sm:$0xff]
        %v1761 = vld [vmem:[#allocation14 + $0xb8] sm:$0xff]
        %v1762 = vld [vmem:[#allocation14 + $0xc0] sm:$0xff]
        %v1763 = vld [vmem:[#allocation14 + $0xc8] sm:$0xff]
        %v1764 = vld [vmem:[#allocation14 + $0xd0] sm:$0xff]
        %v1765 = vld [vmem:[#allocation14 + $0xd8] sm:$0xff]
        %v1766 = vld [vmem:[#allocation14 + $0xe0] sm:$0xff]
        %v1767 = vld [vmem:[#allocation14 + $0xe8] sm:$0xff]
        %v1768 = vld [vmem:[#allocation14 + $0xf0] sm:$0xff]
        %v1769 = vld [vmem:[#allocation14 + $0xf8] sm:$0xff]
        %v1770 = vld [vmem:[%s10] sm:$0xf]
        %v1772 = vperm.slane %v1770, 0
        %v1773 = vperm.slane %v1770, 1
        %v1774 = vperm.slane %v1770, 2
        %v1775 = vperm.slane %v1770, 3
        %v1788 = vunpack.c.l.b16 %v1730
        %v1789 = vunpack.c.l.b16 %v1731
        %v1790 = vunpack.c.l.b16 %v1732
        %v1791 = vunpack.c.l.b16 %v1733
        %v1792 = vunpack.c.l.b16 %v1734
        %v1793 = vunpack.c.l.b16 %v1735
        %v1794 = vunpack.c.l.b16 %v1736
        %v1795 = vunpack.c.l.b16 %v1737
        %v1796 = vrot.slane %v1789, 7
        %v1797 = vsel %vm813, %v1796, %v1788
        %v1798 = vrot.slane %v1790, 6
        %v1799 = vsel %vm815, %v1798, %v1797
        %v1800 = vrot.slane %v1791, 5
        %v1801 = vsel %vm817, %v1800, %v1799
        %v1802 = vrot.slane %v1792, 4
        %v1803 = vsel %vm819, %v1802, %v1801
        %v1804 = vrot.slane %v1793, 3
        %v1805 = vsel %vm821, %v1804, %v1803
        %v1806 = vrot.slane %v1794, 2
        %v1807 = vsel %vm823, %v1806, %v1805
        %v1808 = vrot.slane %v1795, 1
        %v1809 = vsel %vm825, %v1808, %v1807
        %v1810 = vpack.c.b16 %v1809, %v1809
        %v1844 = vunpack.c.l.b16 %v1738
        %v1845 = vunpack.c.h.b16 %v1738
        %v1846 = vunpack.c.l.b16 %v1739
        %v1847 = vunpack.c.h.b16 %v1739
        %v1848 = vunpack.c.l.b16 %v1740
        %v1849 = vunpack.c.h.b16 %v1740
        %v1850 = vunpack.c.l.b16 %v1741
        %v1851 = vunpack.c.h.b16 %v1741
        %v1852 = vunpack.c.l.b16 %v1742
        %v1853 = vunpack.c.h.b16 %v1742
        %v1854 = vunpack.c.l.b16 %v1743
        %v1855 = vunpack.c.h.b16 %v1743
        %v1856 = vunpack.c.l.b16 %v1744
        %v1857 = vunpack.c.h.b16 %v1744
        %v1858 = vunpack.c.l.b16 %v1745
        %v1859 = vunpack.c.h.b16 %v1745
        %v1860 = vunpack.c.l.b16 %v1746
        %v1861 = vunpack.c.h.b16 %v1746
        %v1862 = vunpack.c.l.b16 %v1747
        %v1863 = vunpack.c.h.b16 %v1747
        %v1864 = vunpack.c.l.b16 %v1748
        %v1865 = vunpack.c.h.b16 %v1748
        %v1866 = vunpack.c.l.b16 %v1749
        %v1867 = vunpack.c.h.b16 %v1749
        %v1868 = vunpack.c.l.b16 %v1750
        %v1869 = vunpack.c.h.b16 %v1750
        %v1870 = vunpack.c.l.b16 %v1751
        %v1871 = vunpack.c.h.b16 %v1751
        %v1872 = vunpack.c.l.b16 %v1752
        %v1873 = vunpack.c.h.b16 %v1752
        %v1874 = vunpack.c.l.b16 %v1753
        %v1875 = vunpack.c.h.b16 %v1753
        %v1876 = vunpack.c.l.b16 %v1754
        %v1877 = vunpack.c.h.b16 %v1754
        %v1878 = vunpack.c.l.b16 %v1755
        %v1879 = vunpack.c.h.b16 %v1755
        %v1880 = vunpack.c.l.b16 %v1756
        %v1881 = vunpack.c.h.b16 %v1756
        %v1882 = vunpack.c.l.b16 %v1757
        %v1883 = vunpack.c.h.b16 %v1757
        %v1884 = vunpack.c.l.b16 %v1758
        %v1885 = vunpack.c.h.b16 %v1758
        %v1886 = vunpack.c.l.b16 %v1759
        %v1887 = vunpack.c.h.b16 %v1759
        %v1888 = vunpack.c.l.b16 %v1760
        %v1889 = vunpack.c.h.b16 %v1760
        %v1890 = vunpack.c.l.b16 %v1761
        %v1891 = vunpack.c.h.b16 %v1761
        %v1892 = vunpack.c.l.b16 %v1762
        %v1893 = vunpack.c.h.b16 %v1762
        %v1894 = vunpack.c.l.b16 %v1763
        %v1895 = vunpack.c.h.b16 %v1763
        %v1896 = vunpack.c.l.b16 %v1764
        %v1897 = vunpack.c.h.b16 %v1764
        %v1898 = vunpack.c.l.b16 %v1765
        %v1899 = vunpack.c.h.b16 %v1765
        %v1900 = vunpack.c.l.b16 %v1766
        %v1901 = vunpack.c.h.b16 %v1766
        %v1902 = vunpack.c.l.b16 %v1767
        %v1903 = vunpack.c.h.b16 %v1767
        %v1904 = vunpack.c.l.b16 %v1768
        %v1905 = vunpack.c.h.b16 %v1768
        %v1906 = vunpack.c.l.b16 %v1769
        %v1907 = vunpack.c.h.b16 %v1769
        %v1908 = vpack.c.b16 %v1848, %v1844
        %v1909 = vpack.c.b16 %v1849, %v1845
        %v1910 = vpack.c.b16 %v1850, %v1846
        %v1911 = vpack.c.b16 %v1851, %v1847
        %v1912 = vpack.c.b16 %v1856, %v1852
        %v1913 = vpack.c.b16 %v1857, %v1853
        %v1914 = vpack.c.b16 %v1858, %v1854
        %v1915 = vpack.c.b16 %v1859, %v1855
        %v1916 = vpack.c.b16 %v1864, %v1860
        %v1917 = vpack.c.b16 %v1865, %v1861
        %v1918 = vpack.c.b16 %v1866, %v1862
        %v1919 = vpack.c.b16 %v1867, %v1863
        %v1920 = vpack.c.b16 %v1872, %v1868
        %v1921 = vpack.c.b16 %v1873, %v1869
        %v1922 = vpack.c.b16 %v1874, %v1870
        %v1923 = vpack.c.b16 %v1875, %v1871
        %v1924 = vpack.c.b16 %v1880, %v1876
        %v1925 = vpack.c.b16 %v1881, %v1877
        %v1926 = vpack.c.b16 %v1882, %v1878
        %v1927 = vpack.c.b16 %v1883, %v1879
        %v1928 = vpack.c.b16 %v1888, %v1884
        %v1929 = vpack.c.b16 %v1889, %v1885
        %v1930 = vpack.c.b16 %v1890, %v1886
        %v1931 = vpack.c.b16 %v1891, %v1887
        %v1932 = vpack.c.b16 %v1896, %v1892
        %v1933 = vpack.c.b16 %v1897, %v1893
        %v1934 = vpack.c.b16 %v1898, %v1894
        %v1935 = vpack.c.b16 %v1899, %v1895
        %v1936 = vpack.c.b16 %v1904, %v1900
        %v1937 = vpack.c.b16 %v1905, %v1901
        %v1938 = vpack.c.b16 %v1906, %v1902
        %v1939 = vpack.c.b16 %v1907, %v1903
        %1972 = vmatpush.bf16.msra.mxu0 %v1936
        %1973 = vmatpush.bf16.msra.mxu0 %v1932
        %1974 = vmatpush.bf16.msra.mxu0 %v1928
        %1975 = vmatpush.bf16.msra.mxu0 %v1924
        %1976 = vmatpush.bf16.msra.mxu0 %v1920
        %1977 = vmatpush.bf16.msra.mxu0 %v1916
        %1978 = vmatpush.bf16.msra.mxu0 %v1912
        %1979 = vmatpush.bf16.msra.mxu0 %v1908
        %1980 = vmatmul.bf16.gmra.mxu0 %v1810
        %v1981 = vpop.f32.mrf.mxu0
        %v1982 = vadd.f32 %v1772, %v1981
        %v1983 = vpop.f32.mrf.mxu0
        %1984 = vdwg.mxu0
        %1985 = vmatpush.bf16.msra.mxu0 %v1937
        %1986 = vmatpush.bf16.msra.mxu0 %v1933
        %1987 = vmatpush.bf16.msra.mxu0 %v1929
        %1988 = vmatpush.bf16.msra.mxu0 %v1925
        %1989 = vmatpush.bf16.msra.mxu0 %v1921
        %1990 = vmatpush.bf16.msra.mxu0 %v1917
        %1991 = vmatpush.bf16.msra.mxu0 %v1913
        %1992 = vmatpush.bf16.msra.mxu0 %v1909
        %1993 = vmatmul.bf16.gmra.mxu0 %v1810
        %v1994 = vpop.f32.mrf.mxu0
        %v1995 = vadd.f32 %v1773, %v1994
        %v1996 = vpop.f32.mrf.mxu0
        %1997 = vdwg.mxu0
        %1998 = vmatpush.bf16.msra.mxu0 %v1938
        %1999 = vmatpush.bf16.msra.mxu0 %v1934
        %2000 = vmatpush.bf16.msra.mxu0 %v1930
        %2001 = vmatpush.bf16.msra.mxu0 %v1926
        %2002 = vmatpush.bf16.msra.mxu0 %v1922
        %2003 = vmatpush.bf16.msra.mxu0 %v1918
        %2004 = vmatpush.bf16.msra.mxu0 %v1914
        %2005 = vmatpush.bf16.msra.mxu0 %v1910
        %2006 = vmatmul.bf16.gmra.mxu0 %v1810
        %v2007 = vpop.f32.mrf.mxu0
        %v2008 = vadd.f32 %v1774, %v2007
        %v2009 = vpop.f32.mrf.mxu0
        %2010 = vdwg.mxu0
        %2011 = vmatpush.bf16.msra.mxu0 %v1939
        %2012 = vmatpush.bf16.msra.mxu0 %v1935
        %2013 = vmatpush.bf16.msra.mxu0 %v1931
        %2014 = vmatpush.bf16.msra.mxu0 %v1927
        %2015 = vmatpush.bf16.msra.mxu0 %v1923
        %2016 = vmatpush.bf16.msra.mxu0 %v1919
        %2017 = vmatpush.bf16.msra.mxu0 %v1915
        %2018 = vmatpush.bf16.msra.mxu0 %v1911
        %2019 = vmatmul.bf16.gmra.mxu0 %v1810
        %v2020 = vpop.f32.mrf.mxu0
        %v2021 = vadd.f32 %v1775, %v2020
        %v2022 = vpop.f32.mrf.mxu0
        %2023 = vdwg.mxu0
        %v2024 = vmax.f32 %v1982, 0.0
        %v2025 = vmax.f32 %v1995, 0.0
        %v2026 = vmax.f32 %v2008, 0.0
        %v2027 = vmax.f32 %v2021, 0.0
        %v2028 = vpack.c.bf16 %v2024, %v2024
        %v2029 = vpack.c.bf16 %v2025, %v2025
        %v2030 = vpack.c.bf16 %v2026, %v2026
        %v2031 = vpack.c.bf16 %v2027, %v2027
        %v2032 = vld [vmem:[#allocation16] sm:$0xf]
        %v2033 = vld [vmem:[#allocation16 + $0x4] sm:$0xf]
        %v2034 = vld [vmem:[#allocation16 + $0x8] sm:$0xf]
        %v2035 = vld [vmem:[#allocation16 + $0xc] sm:$0xf]
        %v2036 = vld [vmem:[#allocation16 + $0x10] sm:$0xf]
        %v2037 = vld [vmem:[#allocation16 + $0x14] sm:$0xf]
        %v2038 = vld [vmem:[#allocation16 + $0x18] sm:$0xf]
        %v2039 = vld [vmem:[#allocation16 + $0x1c] sm:$0xf]
        %v2040 = vld [vmem:[#allocation16 + $0x20] sm:$0xf]
        %v2041 = vld [vmem:[#allocation16 + $0x24] sm:$0xf]
        %v2042 = vld [vmem:[#allocation16 + $0x28] sm:$0xf]
        %v2043 = vld [vmem:[#allocation16 + $0x2c] sm:$0xf]
        %v2044 = vld [vmem:[#allocation16 + $0x30] sm:$0xf]
        %v2045 = vld [vmem:[#allocation16 + $0x34] sm:$0xf]
        %v2046 = vld [vmem:[#allocation16 + $0x38] sm:$0xf]
        %v2047 = vld [vmem:[#allocation16 + $0x3c] sm:$0xf]
        %v2048 = vld [vmem:[#allocation16 + $0x40] sm:$0xf]
        %v2049 = vld [vmem:[#allocation16 + $0x44] sm:$0xf]
        %v2050 = vld [vmem:[#allocation16 + $0x48] sm:$0xf]
        %v2051 = vld [vmem:[#allocation16 + $0x4c] sm:$0xf]
        %v2052 = vld [vmem:[#allocation16 + $0x50] sm:$0xf]
        %v2053 = vld [vmem:[#allocation16 + $0x54] sm:$0xf]
        %v2054 = vld [vmem:[#allocation16 + $0x58] sm:$0xf]
        %v2055 = vld [vmem:[#allocation16 + $0x5c] sm:$0xf]
        %v2056 = vld [vmem:[#allocation16 + $0x60] sm:$0xf]
        %v2057 = vld [vmem:[#allocation16 + $0x64] sm:$0xf]
        %v2058 = vld [vmem:[#allocation16 + $0x68] sm:$0xf]
        %v2059 = vld [vmem:[#allocation16 + $0x6c] sm:$0xf]
        %v2060 = vld [vmem:[#allocation16 + $0x70] sm:$0xf]
        %v2061 = vld [vmem:[#allocation16 + $0x74] sm:$0xf]
        %v2062 = vld [vmem:[#allocation16 + $0x78] sm:$0xf]
        %v2063 = vld [vmem:[#allocation16 + $0x7c] sm:$0xf]
        %v2064 = vld [vmem:[#allocation16 + $0x80] sm:$0xf]
        %v2065 = vld [vmem:[#allocation16 + $0x84] sm:$0xf]
        %v2066 = vld [vmem:[#allocation16 + $0x88] sm:$0xf]
        %v2067 = vld [vmem:[#allocation16 + $0x8c] sm:$0xf]
        %v2068 = vld [vmem:[#allocation16 + $0x90] sm:$0xf]
        %v2069 = vld [vmem:[#allocation16 + $0x94] sm:$0xf]
        %v2070 = vld [vmem:[#allocation16 + $0x98] sm:$0xf]
        %v2071 = vld [vmem:[#allocation16 + $0x9c] sm:$0xf]
        %v2072 = vld [vmem:[#allocation16 + $0xa0] sm:$0xf]
        %v2073 = vld [vmem:[#allocation16 + $0xa4] sm:$0xf]
        %v2074 = vld [vmem:[#allocation16 + $0xa8] sm:$0xf]
        %v2075 = vld [vmem:[#allocation16 + $0xac] sm:$0xf]
        %v2076 = vld [vmem:[#allocation16 + $0xb0] sm:$0xf]
        %v2077 = vld [vmem:[#allocation16 + $0xb4] sm:$0xf]
        %v2078 = vld [vmem:[#allocation16 + $0xb8] sm:$0xf]
        %v2079 = vld [vmem:[#allocation16 + $0xbc] sm:$0xf]
        %v2080 = vld [vmem:[#allocation16 + $0xc0] sm:$0xf]
        %v2081 = vld [vmem:[#allocation16 + $0xc4] sm:$0xf]
        %v2082 = vld [vmem:[#allocation16 + $0xc8] sm:$0xf]
        %v2083 = vld [vmem:[#allocation16 + $0xcc] sm:$0xf]
        %v2084 = vld [vmem:[#allocation16 + $0xd0] sm:$0xf]
        %v2085 = vld [vmem:[#allocation16 + $0xd4] sm:$0xf]
        %v2086 = vld [vmem:[#allocation16 + $0xd8] sm:$0xf]
        %v2087 = vld [vmem:[#allocation16 + $0xdc] sm:$0xf]
        %v2088 = vld [vmem:[#allocation16 + $0xe0] sm:$0xf]
        %v2089 = vld [vmem:[#allocation16 + $0xe4] sm:$0xf]
        %v2090 = vld [vmem:[#allocation16 + $0xe8] sm:$0xf]
        %v2091 = vld [vmem:[#allocation16 + $0xec] sm:$0xf]
        %v2092 = vld [vmem:[#allocation16 + $0xf0] sm:$0xf]
        %v2093 = vld [vmem:[#allocation16 + $0xf4] sm:$0xf]
        %v2094 = vld [vmem:[#allocation16 + $0xf8] sm:$0xf]
        %v2095 = vld [vmem:[#allocation16 + $0xfc] sm:$0xf]
        %v2096 = vld [vmem:[%s12] sm:$0x1]
        %v2098 = vperm.slane %v2096, 0
        %v2164 = vunpack.c.l.b16 %v2032
        %v2165 = vunpack.c.l.b16 %v2033
        %v2166 = vunpack.c.l.b16 %v2034
        %v2167 = vunpack.c.l.b16 %v2035
        %v2168 = vunpack.c.l.b16 %v2036
        %v2169 = vunpack.c.l.b16 %v2037
        %v2170 = vunpack.c.l.b16 %v2038
        %v2171 = vunpack.c.l.b16 %v2039
        %v2172 = vunpack.c.l.b16 %v2040
        %v2173 = vunpack.c.l.b16 %v2041
        %v2174 = vunpack.c.l.b16 %v2042
        %v2175 = vunpack.c.l.b16 %v2043
        %v2176 = vunpack.c.l.b16 %v2044
        %v2177 = vunpack.c.l.b16 %v2045
        %v2178 = vunpack.c.l.b16 %v2046
        %v2179 = vunpack.c.l.b16 %v2047
        %v2180 = vunpack.c.l.b16 %v2048
        %v2181 = vunpack.c.l.b16 %v2049
        %v2182 = vunpack.c.l.b16 %v2050
        %v2183 = vunpack.c.l.b16 %v2051
        %v2184 = vunpack.c.l.b16 %v2052
        %v2185 = vunpack.c.l.b16 %v2053
        %v2186 = vunpack.c.l.b16 %v2054
        %v2187 = vunpack.c.l.b16 %v2055
        %v2188 = vunpack.c.l.b16 %v2056
        %v2189 = vunpack.c.l.b16 %v2057
        %v2190 = vunpack.c.l.b16 %v2058
        %v2191 = vunpack.c.l.b16 %v2059
        %v2192 = vunpack.c.l.b16 %v2060
        %v2193 = vunpack.c.l.b16 %v2061
        %v2194 = vunpack.c.l.b16 %v2062
        %v2195 = vunpack.c.l.b16 %v2063
        %v2196 = vunpack.c.l.b16 %v2064
        %v2197 = vunpack.c.l.b16 %v2065
        %v2198 = vunpack.c.l.b16 %v2066
        %v2199 = vunpack.c.l.b16 %v2067
        %v2200 = vunpack.c.l.b16 %v2068
        %v2201 = vunpack.c.l.b16 %v2069
        %v2202 = vunpack.c.l.b16 %v2070
        %v2203 = vunpack.c.l.b16 %v2071
        %v2204 = vunpack.c.l.b16 %v2072
        %v2205 = vunpack.c.l.b16 %v2073
        %v2206 = vunpack.c.l.b16 %v2074
        %v2207 = vunpack.c.l.b16 %v2075
        %v2208 = vunpack.c.l.b16 %v2076
        %v2209 = vunpack.c.l.b16 %v2077
        %v2210 = vunpack.c.l.b16 %v2078
        %v2211 = vunpack.c.l.b16 %v2079
        %v2212 = vunpack.c.l.b16 %v2080
        %v2213 = vunpack.c.l.b16 %v2081
        %v2214 = vunpack.c.l.b16 %v2082
        %v2215 = vunpack.c.l.b16 %v2083
        %v2216 = vunpack.c.l.b16 %v2084
        %v2217 = vunpack.c.l.b16 %v2085
        %v2218 = vunpack.c.l.b16 %v2086
        %v2219 = vunpack.c.l.b16 %v2087
        %v2220 = vunpack.c.l.b16 %v2088
        %v2221 = vunpack.c.l.b16 %v2089
        %v2222 = vunpack.c.l.b16 %v2090
        %v2223 = vunpack.c.l.b16 %v2091
        %v2224 = vunpack.c.l.b16 %v2092
        %v2225 = vunpack.c.l.b16 %v2093
        %v2226 = vunpack.c.l.b16 %v2094
        %v2227 = vunpack.c.l.b16 %v2095
        %v2228 = vpack.c.b16 %v2165, %v2164
        %v2229 = vpack.c.b16 %v2167, %v2166
        %v2230 = vpack.c.b16 %v2169, %v2168
        %v2231 = vpack.c.b16 %v2171, %v2170
        %v2232 = vpack.c.b16 %v2173, %v2172
        %v2233 = vpack.c.b16 %v2175, %v2174
        %v2234 = vpack.c.b16 %v2177, %v2176
        %v2235 = vpack.c.b16 %v2179, %v2178
        %v2236 = vpack.c.b16 %v2181, %v2180
        %v2237 = vpack.c.b16 %v2183, %v2182
        %v2238 = vpack.c.b16 %v2185, %v2184
        %v2239 = vpack.c.b16 %v2187, %v2186
        %v2240 = vpack.c.b16 %v2189, %v2188
        %v2241 = vpack.c.b16 %v2191, %v2190
        %v2242 = vpack.c.b16 %v2193, %v2192
        %v2243 = vpack.c.b16 %v2195, %v2194
        %v2244 = vpack.c.b16 %v2197, %v2196
        %v2245 = vpack.c.b16 %v2199, %v2198
        %v2246 = vpack.c.b16 %v2201, %v2200
        %v2247 = vpack.c.b16 %v2203, %v2202
        %v2248 = vpack.c.b16 %v2205, %v2204
        %v2249 = vpack.c.b16 %v2207, %v2206
        %v2250 = vpack.c.b16 %v2209, %v2208
        %v2251 = vpack.c.b16 %v2211, %v2210
        %v2252 = vpack.c.b16 %v2213, %v2212
        %v2253 = vpack.c.b16 %v2215, %v2214
        %v2254 = vpack.c.b16 %v2217, %v2216
        %v2255 = vpack.c.b16 %v2219, %v2218
        %v2256 = vpack.c.b16 %v2221, %v2220
        %v2257 = vpack.c.b16 %v2223, %v2222
        %v2258 = vpack.c.b16 %v2225, %v2224
        %v2259 = vpack.c.b16 %v2227, %v2226
        %2292 = vmatpush.bf16.msra.mxu0 %v2235
        %2293 = vmatpush.bf16.msra.mxu0 %v2234
        %2294 = vmatpush.bf16.msra.mxu0 %v2233
        %2295 = vmatpush.bf16.msra.mxu0 %v2232
        %2296 = vmatpush.bf16.msra.mxu0 %v2231
        %2297 = vmatpush.bf16.msra.mxu0 %v2230
        %2298 = vmatpush.bf16.msra.mxu0 %v2229
        %2299 = vmatpush.bf16.msra.mxu0 %v2228
        %2300 = vmatmul.bf16.gmra.mxu0 %v2028
        %v2301 = vpop.f32.mrf.mxu0
        %v2302 = vadd.f32 %v2098, %v2301
        %v2303 = vpop.f32.mrf.mxu0
        %2304 = vdwg.mxu0
        %2305 = vmatpush.bf16.msra.mxu0 %v2243
        %2306 = vmatpush.bf16.msra.mxu0 %v2242
        %2307 = vmatpush.bf16.msra.mxu0 %v2241
        %2308 = vmatpush.bf16.msra.mxu0 %v2240
        %2309 = vmatpush.bf16.msra.mxu0 %v2239
        %2310 = vmatpush.bf16.msra.mxu0 %v2238
        %2311 = vmatpush.bf16.msra.mxu0 %v2237
        %2312 = vmatpush.bf16.msra.mxu0 %v2236
        %2313 = vmatmul.bf16.gmra.mxu0 %v2029
        %v2314 = vpop.f32.mrf.mxu0
        %v2315 = vadd.f32 %v2302, %v2314
        %v2316 = vpop.f32.mrf.mxu0
        %2317 = vdwg.mxu0
        %2318 = vmatpush.bf16.msra.mxu0 %v2251
        %2319 = vmatpush.bf16.msra.mxu0 %v2250
        %2320 = vmatpush.bf16.msra.mxu0 %v2249
        %2321 = vmatpush.bf16.msra.mxu0 %v2248
        %2322 = vmatpush.bf16.msra.mxu0 %v2247
        %2323 = vmatpush.bf16.msra.mxu0 %v2246
        %2324 = vmatpush.bf16.msra.mxu0 %v2245
        %2325 = vmatpush.bf16.msra.mxu0 %v2244
        %2326 = vmatmul.bf16.gmra.mxu0 %v2030
        %v2327 = vpop.f32.mrf.mxu0
        %v2328 = vadd.f32 %v2315, %v2327
        %v2329 = vpop.f32.mrf.mxu0
        %2330 = vdwg.mxu0
        %2331 = vmatpush.bf16.msra.mxu0 %v2259
        %2332 = vmatpush.bf16.msra.mxu0 %v2258
        %2333 = vmatpush.bf16.msra.mxu0 %v2257
        %2334 = vmatpush.bf16.msra.mxu0 %v2256
        %2335 = vmatpush.bf16.msra.mxu0 %v2255
        %2336 = vmatpush.bf16.msra.mxu0 %v2254
        %2337 = vmatpush.bf16.msra.mxu0 %v2253
        %2338 = vmatpush.bf16.msra.mxu0 %v2252
        %2339 = vmatmul.bf16.gmra.mxu0 %v2031
        %v2340 = vpop.f32.mrf.mxu0
        %v2341 = vadd.f32 %v2328, %v2340
        %v2342 = vpop.f32.mrf.mxu0
        %2343 = vdwg.mxu0
        %v2345 = vrot.slane %v2341, 1
        %v2346 = vrot.slane %v2341, 2
        %v2347 = vrot.slane %v2341, 3
        %v2348 = vrot.slane %v2341, 4
        %v2349 = vrot.slane %v2341, 5
        %v2350 = vrot.slane %v2341, 6
        %v2351 = vrot.slane %v2341, 7
        %v2360 = vadd.f32 %v1722, %v2341
        %v2361 = vadd.f32 %v1723, %v2345
        %v2362 = vadd.f32 %v1724, %v2346
        %v2363 = vadd.f32 %v1725, %v2347
        %v2364 = vadd.f32 %v1726, %v2348
        %v2365 = vadd.f32 %v1727, %v2349
        %v2366 = vadd.f32 %v1728, %v2350
        %v2367 = vadd.f32 %v1729, %v2351
        %v2376 = vrot.slane %v2361, 7
        %v2377 = vsel %vm813, %v2376, %v2360
        %v2378 = vrot.slane %v2362, 6
        %v2379 = vsel %vm815, %v2378, %v2377
        %v2380 = vrot.slane %v2363, 5
        %v2381 = vsel %vm817, %v2380, %v2379
        %v2382 = vrot.slane %v2364, 4
        %v2383 = vsel %vm819, %v2382, %v2381
        %v2384 = vrot.slane %v2365, 3
        %v2385 = vsel %vm821, %v2384, %v2383
        %v2386 = vrot.slane %v2366, 2
        %v2387 = vsel %vm823, %v2386, %v2385
        %v2388 = vrot.slane %v2367, 1
        %v2389 = vsel %vm825, %v2388, %v2387
        %2391 = vadd.xlane.f32.xlu0 %v2389
        %v2392 = vpop.xlane.xlu0 %2391
        %v2393 = vmul.f32 %v2392, %v1611
        %v2395 = vrot.slane %v2393, 1
        %v2396 = vrot.slane %v2393, 2
        %v2397 = vrot.slane %v2393, 3
        %v2398 = vrot.slane %v2393, 4
        %v2399 = vrot.slane %v2393, 5
        %v2400 = vrot.slane %v2393, 6
        %v2401 = vrot.slane %v2393, 7
        %v2410 = vsub.f32 %v2360, %v2393
        %v2411 = vsub.f32 %v2361, %v2395
        %v2412 = vsub.f32 %v2362, %v2396
        %v2413 = vsub.f32 %v2363, %v2397
        %v2414 = vsub.f32 %v2364, %v2398
        %v2415 = vsub.f32 %v2365, %v2399
        %v2416 = vsub.f32 %v2366, %v2400
        %v2417 = vsub.f32 %v2367, %v2401
        %v2418 = vmul.f32 %v2410, %v2410
        %v2419 = vmul.f32 %v2411, %v2411
        %v2420 = vmul.f32 %v2412, %v2412
        %v2421 = vmul.f32 %v2413, %v2413
        %v2422 = vmul.f32 %v2414, %v2414
        %v2423 = vmul.f32 %v2415, %v2415
        %v2424 = vmul.f32 %v2416, %v2416
        %v2425 = vmul.f32 %v2417, %v2417
        %v2434 = vrot.slane %v2419, 7
        %v2435 = vsel %vm813, %v2434, %v2418
        %v2436 = vrot.slane %v2420, 6
        %v2437 = vsel %vm815, %v2436, %v2435
        %v2438 = vrot.slane %v2421, 5
        %v2439 = vsel %vm817, %v2438, %v2437
        %v2440 = vrot.slane %v2422, 4
        %v2441 = vsel %vm819, %v2440, %v2439
        %v2442 = vrot.slane %v2423, 3
        %v2443 = vsel %vm821, %v2442, %v2441
        %v2444 = vrot.slane %v2424, 2
        %v2445 = vsel %vm823, %v2444, %v2443
        %v2446 = vrot.slane %v2425, 1
        %v2447 = vsel %vm825, %v2446, %v2445
        %2449 = vadd.xlane.f32.xlu0 %v2447
        %v2450 = vpop.xlane.xlu0 %2449
        %v2451 = vmul.f32 %v2450, %v1611
        %v2452 = vadd.f32 %v2451, 1e-05
        %v2453 = vrsqrt.pop %v2452
        %v2454 = vmul.f32 %v2453, %v2452
        %v2455 = vmul.f32 %v2454, %v2453
        %v2456 = vmul.f32 0.5, %v2455
        %v2457 = vsub.f32 1.5, %v2456
        %v2458 = vmul.f32 %v2453, %v2457
        %vm2459 = vweird.f32 %v2452
        %vm2460 = vweird.f32 %v2453
        %vm2461 = vmor %vm2459, %vm2460
        %v2462 = vsel %vm2461, %v2453, %v2458
        %v2464 = vrot.slane %v2462, 1
        %v2465 = vrot.slane %v2462, 2
        %v2466 = vrot.slane %v2462, 3
        %v2467 = vrot.slane %v2462, 4
        %v2468 = vrot.slane %v2462, 5
        %v2469 = vrot.slane %v2462, 6
        %v2470 = vrot.slane %v2462, 7
        %v2479 = vmul.f32 %v2410, %v2462
        %v2480 = vmul.f32 %v2411, %v2464
        %v2481 = vmul.f32 %v2412, %v2465
        %v2482 = vmul.f32 %v2413, %v2466
        %v2483 = vmul.f32 %v2414, %v2467
        %v2484 = vmul.f32 %v2415, %v2468
        %v2485 = vmul.f32 %v2416, %v2469
        %v2486 = vmul.f32 %v2417, %v2470
        %v2487 = vld [vmem:[%s13] sm:$0x1]
        %v2489 = vperm.slane %v2487, 0
        %v2491 = vmul.f32 %v2479, %v2489
        %v2492 = vmul.f32 %v2480, %v2489
        %v2493 = vmul.f32 %v2481, %v2489
        %v2494 = vmul.f32 %v2482, %v2489
        %v2495 = vmul.f32 %v2483, %v2489
        %v2496 = vmul.f32 %v2484, %v2489
        %v2497 = vmul.f32 %v2485, %v2489
        %v2498 = vmul.f32 %v2486, %v2489
        %v2499 = vld [vmem:[%s14] sm:$0x1]
        %v2501 = vperm.slane %v2499, 0
        %v2503 = vadd.f32 %v2491, %v2501
        %v2504 = vadd.f32 %v2492, %v2501
        %v2505 = vadd.f32 %v2493, %v2501
        %v2506 = vadd.f32 %v2494, %v2501
        %v2507 = vadd.f32 %v2495, %v2501
        %v2508 = vadd.f32 %v2496, %v2501
        %v2509 = vadd.f32 %v2497, %v2501
        %v2510 = vadd.f32 %v2498, %v2501
        %v2519 = vrot.slane %v2504, 7
        %v2520 = vsel %vm813, %v2519, %v2503
        %v2521 = vrot.slane %v2505, 6
        %v2522 = vsel %vm815, %v2521, %v2520
        %v2523 = vrot.slane %v2506, 5
        %v2524 = vsel %vm817, %v2523, %v2522
        %v2525 = vrot.slane %v2507, 4
        %v2526 = vsel %vm819, %v2525, %v2524
        %v2527 = vrot.slane %v2508, 3
        %v2528 = vsel %vm821, %v2527, %v2526
        %v2529 = vrot.slane %v2509, 2
        %v2530 = vsel %vm823, %v2529, %v2528
        %v2531 = vrot.slane %v2510, 1
        %v2532 = vsel %vm825, %v2531, %v2530
        %2534 = vst [vmem:[%s683] sm:$0xff] %v2532
        %s2535 = sand.u32 %s406, 1
        %s2536 = scalar_lea.sflag [#allocation4], %s2535
        %s2537 = sand.u32 %s406, 1
        %s2538 = smul.addr %s2537, 8
        %s2539 = scalar_lea.vmem [#allocation17], %s2538
        // Predicated region
        $region125: #{tpu_custom_call.1} parent=87 // pred_check
          %p2540 = pneg %p416
        $region126: #{tpu_custom_call.1} parent=87 // pred_check_branch
          %2542 = sbr.rel (%p2540) target = $region128
        $region127: #{tpu_custom_call.1} parent=87 // pred_region
          %2544 = vsyncadd %s2536, 0
          %s2545 = smul.addr %s36, 8
          %s2546 = scalar_lea.hbm %s17, %s2545
          %s2548 = sshll.u32 %s2539, 4
          %s2549 = int_to_ptr.vmem [resolvable:$true] %s2548
          %s2550 = sshll.u32 %s2546, 4
          %s2551 = int_to_ptr.hbm [resolvable:$true] %s2550
          %2553 = dma.vmem_to_hbm [thread:$0]  %s2549, 128, %s2551, %s2536
        $region128: #{tpu_custom_call.1} parent=87 // pred_fallthru
          _
      $region88: #{tpu_custom_call.1} parent=5 // pred_fallthru
        _
      %p2554 = scmp.le.s32.totalorder 2, %s31
      // Predicated region
      $region129: #{tpu_custom_call.1} parent=5 // pred_check
        %p2555 = pneg %p2554
      $region130: #{tpu_custom_call.1} parent=5 // pred_check_branch
        %2557 = sbr.rel (%p2555) target = $region132
      $region131: #{tpu_custom_call.1} parent=5 // pred_region
        %s2558 = ssub.s32 %s31, 2
        // Predicated region
        $region133: #{tpu_custom_call.1} parent=131 // pred_check
          %p2559 = pneg %p422
        $region134: #{tpu_custom_call.1} parent=131 // pred_check_branch
          %2561 = sbr.rel (%p2559) target = $region136
        $region135: #{tpu_custom_call.1} parent=131 // pred_region
          %s2562 = sand.u32 %s407, 1
          %s2563 = scalar_lea.sflag [#allocation4], %s2562
          %s2564 = sand.u32 %s407, 1
          %s2565 = smul.addr %s2564, 8
          %s2566 = scalar_lea.vmem [#allocation17], %s2565
          %2568 = dma.done %s2563, 128
        $region136: #{tpu_custom_call.1} parent=131 // pred_fallthru
          _
      $region132: #{tpu_custom_call.1} parent=5 // pred_fallthru
        _
    $region6: #{tpu_custom_call.1} parent=1 // loop_footer
      %s35 = sadd.s32 1, %s31
    $region7: #{tpu_custom_call.1} parent=1 // loop_footer_branch
      %30 = sbr.rel target = $region3
    $region8: #{tpu_custom_call.1} parent=1 // loop_exit
      _
    %2569 = vsyncpa [#allocation3], 1
    %s2570 = scalar_lea.sflag [#allocation3], 1
    %2571 = vsyncpa %s2570, 1
    %2572 = vsyncpa [#allocation6], 1
    %2573 = vsyncpa [#allocation9], 1
    %2574 = vsyncpa [#allocation12], 1
    %2575 = vsyncpa [#allocation15], 1
    %2576 = vsyncpa [#allocation4], 1
    %s2577 = scalar_lea.sflag [#allocation4], 1
    %2578 = vsyncpa %s2577, 1

</llo_original>
